<compile_context>
chip_gen: v5e
topology: v5e:2x2
jax: 0.10.0
libtpu: 0.0.40
codegen_flags: <defaults>
</compile_context>

<pallas_src>
import functools

import jax
import jax.numpy as jnp
from jax import lax
from jax.experimental import pallas as pl
from jax.experimental.pallas import tpu as pltpu

LN_EPS = 1e-5


def _gelu_tanh(x):
    # gelu_pytorch_tanh, kept in f32.
    # TODO(synk): compute in bf16 on v6e/v7x (bf16 VPU/EUP); keep f32 on v5e.
    c = jnp.float32(0.7978845608028654)  # sqrt(2/pi)
    return 0.5 * x * (1.0 + jnp.tanh(c * (x + 0.044715 * x * x * x)))


# ---------------------------------------------------------------------------
# Fused block kernel
# ---------------------------------------------------------------------------
def _block_kernel(*refs, num_heads, head_size, eps, has_residual):
    f32 = jnp.float32
    if has_residual:
        x_ref, res_ref = refs[0], refs[1]
        rest = refs[2:]
    else:
        x_ref, res_ref = refs[0], None
        rest = refs[1:]
    (ln1_w, ln1_b, ln2_w, ln2_b,
     qkvw_ref, qkvb_ref, pw_ref, pb_ref,
     fw_ref, fb_ref, mw_ref, mb_ref,
     out_ref, resid_ref, qf_s, attn_s) = rest

    Hn, D = num_heads, head_size
    T = x_ref.shape[0]

    # ---- ln_1 (FastLayerNorm): x = hidden (+ residual); h = LN(x) ----------
    x = x_ref[...]
    if has_residual:                       # static Python branch
        x = x + res_ref[...]
    mean = jnp.mean(x, axis=-1, keepdims=True)
    xc = x - mean
    var = jnp.mean(xc * xc, axis=-1, keepdims=True)
    h = xc * lax.rsqrt(var + eps) * ln1_w[...] + ln1_b[...]
    h_bf = h.astype(jnp.bfloat16)

    # ---- fused MQA QKV projection: ONE [H, (Hn+2)*D] matmul ----------------
    # (softmax scale pre-folded into the Q columns of weight and bias)
    qkv = jnp.dot(h_bf, qkvw_ref[...], preferred_element_type=f32) + qkvb_ref[...]
    q = qkv[:, :Hn * D]                                     # [T, Hn*D] scaled
    k_bf = qkv[:, Hn * D:Hn * D + D].astype(jnp.bfloat16)   # [T, D] shared K
    v_bf = qkv[:, Hn * D + D:].astype(jnp.bfloat16)         # [T, D] shared V

    # TODO(synk): paged_attention.reshape_and_cache (KV-cache writeback via
    # `slots`) and the decode-time paged_attention path are serving side
    # effects; this kernel implements the prefill (cu_seqlen_prefill) path.

    # ---- causal MQA attention, heads folded into the row dimension ---------
    # fold q [T, Hn*D] -> [Hn*T, D]; row h*T + t == (head h, token t)
    for hh in range(Hn):
        qf_s[hh * T:(hh + 1) * T, :] = (
            q[:, hh * D:(hh + 1) * D].astype(jnp.bfloat16))
    q_f = qf_s[...]                                          # [Hn*T, D] bf16

    s = lax.dot_general(q_f, k_bf, (((1,), (1,)), ((), ())),
                        preferred_element_type=f32)          # [Hn*T, T]
    r_i = lax.broadcasted_iota(jnp.int32, (Hn * T, T), 0)
    k_i = lax.broadcasted_iota(jnp.int32, (Hn * T, T), 1)
    if (T & (T - 1)) == 0:                                   # static branch
        q_i = jnp.bitwise_and(r_i, T - 1)                    # row % T
    else:
        q_i = r_i % T
    s = jnp.where(k_i <= q_i, s, f32(-1e30))
    m = jnp.max(s, axis=-1, keepdims=True)
    p = jnp.exp(s - m)
    l = jnp.sum(p, axis=-1, keepdims=True)
    o_f = jnp.dot(p.astype(jnp.bfloat16), v_bf,
                  preferred_element_type=f32)                # [Hn*T, D]
    o_f = o_f * pl.reciprocal(l)                             # exact reciprocal

    # unfold [Hn*T, D] -> lane-dense [T, Hn*D] (bf16 scratch, out-proj input)
    for hh in range(Hn):
        attn_s[:, hh * D:(hh + 1) * D] = (
            o_f[hh * T:(hh + 1) * T, :].astype(jnp.bfloat16))

    # ---- attention output projection + residual add -------------------------
    attn_out = (jnp.dot(attn_s[...], pw_ref[...],
                        preferred_element_type=f32) + pb_ref[...])
    x2 = attn_out + x
    resid_ref[...] = x2

    # ---- ln_2 ----------------------------------------------------------------
    mean2 = jnp.mean(x2, axis=-1, keepdims=True)
    xc2 = x2 - mean2
    var2 = jnp.mean(xc2 * xc2, axis=-1, keepdims=True)
    h2 = xc2 * lax.rsqrt(var2 + eps) * ln2_w[...] + ln2_b[...]

    # ---- MLP: c_fc -> gelu(tanh) -> c_proj ----------------------------------
    fc = (jnp.dot(h2.astype(jnp.bfloat16), fw_ref[...],
                  preferred_element_type=f32) + fb_ref[...])
    fc = _gelu_tanh(fc)
    # TODO(synk): emit mlp_out in bf16 if the next layer consumes bf16.
    out_ref[...] = (jnp.dot(fc.astype(jnp.bfloat16), mw_ref[...],
                            preferred_element_type=f32) + mb_ref[...])


# ---------------------------------------------------------------------------
# One-time host-side parameter prep (mirrors weight loading)
# ---------------------------------------------------------------------------
def prepare_block_params(raw, *, num_heads, head_size):
    """Cast weights to bf16 and fold the softmax scale into the Q columns of
    the fused c_attn weight/bias (one-time, at load time)."""
    scale = head_size ** -0.5
    hnd = num_heads * head_size
    col_scale = jnp.concatenate(
        [jnp.full((hnd,), scale, jnp.float32),
         jnp.ones((2 * head_size,), jnp.float32)])
    p = dict(raw)
    p["c_attn_wT"] = (raw["c_attn_wT"] * col_scale).astype(jnp.bfloat16)
    p["c_attn_b"] = raw["c_attn_b"] * col_scale
    p["attn_proj_wT"] = raw["attn_proj_wT"].astype(jnp.bfloat16)
    p["c_fc_wT"] = raw["c_fc_wT"].astype(jnp.bfloat16)
    p["mlp_proj_wT"] = raw["mlp_proj_wT"].astype(jnp.bfloat16)
    return p


# ---------------------------------------------------------------------------
# Wrapper
# ---------------------------------------------------------------------------
def block_forward(params, hidden_states, residual, *, num_heads, head_size,
                  eps=LN_EPS):
    T, H = hidden_states.shape
    has_residual = residual is not None

    def row(v):
        return v.reshape(1, -1)

    args = [hidden_states]
    if has_residual:                       # no placeholder DMA when None
        args.append(residual)
    args += [
        row(params["ln_1_w"]), row(params["ln_1_b"]),
        row(params["ln_2_w"]), row(params["ln_2_b"]),
        params["c_attn_wT"], row(params["c_attn_b"]),
        params["attn_proj_wT"], row(params["attn_proj_b"]),
        params["c_fc_wT"], row(params["c_fc_b"]),
        params["mlp_proj_wT"], row(params["mlp_proj_b"]),
    ]

    kernel = functools.partial(
        _block_kernel, num_heads=num_heads, head_size=head_size, eps=eps,
        has_residual=has_residual)
    out_shape = (jax.ShapeDtypeStruct((T, H), jnp.float32),
                 jax.ShapeDtypeStruct((T, H), jnp.float32))
    # TODO(synk): tile the token axis (grid over query tiles, flash online
    # softmax) for production prefill lengths; grid=(1,) is fine at this size.
    return pl.pallas_call(
        kernel,
        out_shape=out_shape,
        grid=(1,),
        in_specs=[pl.BlockSpec(a.shape, lambda i, nd=a.ndim: (0,) * nd)
                  for a in args],
        out_specs=tuple(pl.BlockSpec(s.shape, lambda i: (0, 0))
                        for s in out_shape),
        scratch_shapes=[
            pltpu.VMEM((num_heads * T, head_size), jnp.bfloat16),   # q fold
            pltpu.VMEM((T, num_heads * head_size), jnp.bfloat16),   # attn out
        ],
        compiler_params=pltpu.CompilerParams(
            dimension_semantics=("arbitrary",)),
    )(*args)


# ---------------------------------------------------------------------------
# Pure-JAX reference (raw/unscaled params; same bf16-operand/f32-acc numerics)
# ---------------------------------------------------------------------------
def block_reference(raw, hidden_states, residual, *, num_heads, head_size):
    f32 = jnp.float32

    def ln(x, w, b):
        mean = jnp.mean(x, -1, keepdims=True)
        var = jnp.mean((x - mean) ** 2, -1, keepdims=True)
        return (x - mean) / jnp.sqrt(var + LN_EPS) * w + b

    def mm(x, w, b):
        return jnp.dot(x.astype(jnp.bfloat16), w.astype(jnp.bfloat16),
                       preferred_element_type=f32) + b

    D, Hn = head_size, num_heads
    res = hidden_states if residual is None else hidden_states + residual
    h = ln(res, raw["ln_1_w"], raw["ln_1_b"])
    T = h.shape[0]
    qkv = mm(h, raw["c_attn_wT"], raw["c_attn_b"])
    q = (qkv[:, :Hn * D] * (D ** -0.5)).reshape(T, Hn, D)
    k = qkv[:, Hn * D:Hn * D + D]
    v = qkv[:, Hn * D + D:]
    s = jnp.einsum("thd,sd->hts", q.astype(jnp.bfloat16),
                   k.astype(jnp.bfloat16), preferred_element_type=f32)
    mask = jnp.tril(jnp.ones((T, T), bool))
    s = jnp.where(mask[None], s, -jnp.inf)
    p = jax.nn.softmax(s, axis=-1)
    o = jnp.einsum("hts,sd->htd", p.astype(jnp.bfloat16),
                   v.astype(jnp.bfloat16), preferred_element_type=f32)
    attn = jnp.transpose(o, (1, 0, 2)).reshape(T, Hn * D)
    attn_out = mm(attn, raw["attn_proj_wT"], raw["attn_proj_b"])
    res2 = attn_out + res
    h2 = ln(res2, raw["ln_2_w"], raw["ln_2_b"])
    fc = jax.nn.gelu(mm(h2, raw["c_fc_wT"], raw["c_fc_b"]),
                     approximate=True)
    out = mm(fc, raw["mlp_proj_wT"], raw["mlp_proj_b"])
    return out, res2


# ---------------------------------------------------------------------------
# Main
# ---------------------------------------------------------------------------
if __name__ == "__main__":
    T = 16            # total tokens (single prefill sequence)
    H = 128           # hidden_size
    NUM_HEADS = 8
    HEAD_SIZE = H // NUM_HEADS   # 16  (scale 0.25 -> exact power-of-2 fold)
    INTER = 4 * H                # MLP intermediate

    key = jax.random.PRNGKey(0)
    ks = jax.random.split(key, 14)

    def nrm(k, shape, scale=0.02):
        return (scale * jax.random.normal(k, shape)).astype(jnp.float32)

    # Raw parameters in torch layouts, pre-transposed to [in, out] (f32).
    raw_params = {
        "ln_1_w": jnp.ones((H,), jnp.float32) + nrm(ks[0], (H,)),
        "ln_1_b": nrm(ks[1], (H,)),
        "ln_2_w": jnp.ones((H,), jnp.float32) + nrm(ks[2], (H,)),
        "ln_2_b": nrm(ks[3], (H,)),
        # torch c_attn weight is [(Hn+2)*D, H]; stored transposed, fused Q|K|V.
        "c_attn_wT": nrm(ks[4], (H, (NUM_HEADS + 2) * HEAD_SIZE)),
        "c_attn_b": nrm(ks[5], ((NUM_HEADS + 2) * HEAD_SIZE,)),
        # attn.c_proj: [H, Hn*D] in torch; stored transposed.
        "attn_proj_wT": nrm(ks[6], (NUM_HEADS * HEAD_SIZE, H)),
        "attn_proj_b": nrm(ks[7], (H,)),
        # mlp.c_fc: [4H, H] in torch; stored transposed.
        "c_fc_wT": nrm(ks[8], (H, INTER)),
        "c_fc_b": nrm(ks[9], (INTER,)),
        # mlp.c_proj: [H, 4H] in torch; stored transposed.
        "mlp_proj_wT": nrm(ks[10], (INTER, H)),
        "mlp_proj_b": nrm(ks[11], (H,)),
    }
    params = prepare_block_params(raw_params, num_heads=NUM_HEADS,
                                  head_size=HEAD_SIZE)

    hidden_states = jax.random.normal(ks[12], (T, H), jnp.float32)
    residual = jax.random.normal(ks[13], (T, H), jnp.float32)

    for res_in in (residual, None):
        mlp_out, resid_out = block_forward(
            params, hidden_states, res_in,
            num_heads=NUM_HEADS, head_size=HEAD_SIZE)
        jax.block_until_ready((mlp_out, resid_out))

        ref_out, ref_resid = block_reference(
            raw_params, hidden_states, res_in,
            num_heads=NUM_HEADS, head_size=HEAD_SIZE)
        assert jnp.allclose(mlp_out, ref_out, atol=2e-3, rtol=2e-3), \
            "mlp_output mismatch"
        assert jnp.allclose(resid_out, ref_resid, atol=2e-3, rtol=2e-3), \
            "residual mismatch"

    print("KERNEL_OK")
</pallas_src>

<mosaic_0001>
module attributes {stable_mosaic.version = 11 : i64} {
  func.func @_block_kernel(%arg0: i32, %arg1: memref<16x128xf32, #tpu.memory_space<vmem>>, %arg2: memref<16x128xf32, #tpu.memory_space<vmem>>, %arg3: memref<1x128xf32, #tpu.memory_space<vmem>>, %arg4: memref<1x128xf32, #tpu.memory_space<vmem>>, %arg5: memref<1x128xf32, #tpu.memory_space<vmem>>, %arg6: memref<1x128xf32, #tpu.memory_space<vmem>>, %arg7: memref<128x160xbf16, #tpu.memory_space<vmem>>, %arg8: memref<1x160xf32, #tpu.memory_space<vmem>>, %arg9: memref<128x128xbf16, #tpu.memory_space<vmem>>, %arg10: memref<1x128xf32, #tpu.memory_space<vmem>>, %arg11: memref<128x512xbf16, #tpu.memory_space<vmem>>, %arg12: memref<1x512xf32, #tpu.memory_space<vmem>>, %arg13: memref<512x128xbf16, #tpu.memory_space<vmem>>, %arg14: memref<1x128xf32, #tpu.memory_space<vmem>>, %arg15: memref<16x128xf32, #tpu.memory_space<vmem>>, %arg16: memref<16x128xf32, #tpu.memory_space<vmem>>, %arg17: memref<128x16xbf16, #tpu.memory_space<vmem>>, %arg18: memref<16x128xbf16, #tpu.memory_space<vmem>>) attributes {dimension_semantics = [#tpu.dimension_semantics<arbitrary>], iteration_bounds = array<i64: 1>, scalar_prefetch = 0 : i64, scratch_operands = 2 : i64, tpu.core_type = #tpu.core_type<tc>, window_params = [{pipeline_mode = #tpu.pipeline_mode<synchronous>, transform_indices = @transform_0, window_bounds = array<i64: 16, 128>}, {pipeline_mode = #tpu.pipeline_mode<synchronous>, transform_indices = @transform_1, window_bounds = array<i64: 16, 128>}, {pipeline_mode = #tpu.pipeline_mode<synchronous>, transform_indices = @transform_2, window_bounds = array<i64: 1, 128>}, {pipeline_mode = #tpu.pipeline_mode<synchronous>, transform_indices = @transform_3, window_bounds = array<i64: 1, 128>}, {pipeline_mode = #tpu.pipeline_mode<synchronous>, transform_indices = @transform_4, window_bounds = array<i64: 1, 128>}, {pipeline_mode = #tpu.pipeline_mode<synchronous>, transform_indices = @transform_5, window_bounds = array<i64: 1, 128>}, {pipeline_mode = #tpu.pipeline_mode<synchronous>, transform_indices = @transform_6, window_bounds = array<i64: 128, 160>}, {pipeline_mode = #tpu.pipeline_mode<synchronous>, transform_indices = @transform_7, window_bounds = array<i64: 1, 160>}, {pipeline_mode = #tpu.pipeline_mode<synchronous>, transform_indices = @transform_8, window_bounds = array<i64: 128, 128>}, {pipeline_mode = #tpu.pipeline_mode<synchronous>, transform_indices = @transform_9, window_bounds = array<i64: 1, 128>}, {pipeline_mode = #tpu.pipeline_mode<synchronous>, transform_indices = @transform_10, window_bounds = array<i64: 128, 512>}, {pipeline_mode = #tpu.pipeline_mode<synchronous>, transform_indices = @transform_11, window_bounds = array<i64: 1, 512>}, {pipeline_mode = #tpu.pipeline_mode<synchronous>, transform_indices = @transform_12, window_bounds = array<i64: 512, 128>}, {pipeline_mode = #tpu.pipeline_mode<synchronous>, transform_indices = @transform_13, window_bounds = array<i64: 1, 128>}, {pipeline_mode = #tpu.pipeline_mode<synchronous>, transform_indices = @transform_14, window_bounds = array<i64: 16, 128>}, {pipeline_mode = #tpu.pipeline_mode<synchronous>, transform_indices = @transform_15, window_bounds = array<i64: 16, 128>}]} {
    %c0 = arith.constant 0 : index
    %c0_0 = arith.constant 0 : index
    %0 = vector.load %arg1[%c0, %c0_0] : memref<16x128xf32, #tpu.memory_space<vmem>>, vector<16x128xf32>
    %c0_1 = arith.constant 0 : index
    %c0_2 = arith.constant 0 : index
    %1 = vector.load %arg2[%c0_1, %c0_2] : memref<16x128xf32, #tpu.memory_space<vmem>>, vector<16x128xf32>
    %2 = arith.addf %0, %1 : vector<16x128xf32>
    %cst = arith.constant dense<0.000000e+00> : vector<16xf32>
    %3 = vector.multi_reduction <add>, %2, %cst [1] : vector<16x128xf32> to vector<16xf32>
    %4 = vector.shape_cast %3 : vector<16xf32> to vector<16x1xf32>
    %cst_3 = arith.constant 1.280000e+02 : f32
    %5 = vector.broadcast %cst_3 : f32 to vector<16x1xf32>
    %6 = arith.divf %4, %5 : vector<16x1xf32>
    %7 = vector.broadcast %6 : vector<16x1xf32> to vector<16x128xf32>
    %8 = arith.subf %2, %7 : vector<16x128xf32>
    %9 = arith.mulf %8, %8 : vector<16x128xf32>
    %cst_4 = arith.constant dense<0.000000e+00> : vector<16xf32>
    %10 = vector.multi_reduction <add>, %9, %cst_4 [1] : vector<16x128xf32> to vector<16xf32>
    %11 = vector.shape_cast %10 : vector<16xf32> to vector<16x1xf32>
    %cst_5 = arith.constant 1.280000e+02 : f32
    %12 = vector.broadcast %cst_5 : f32 to vector<16x1xf32>
    %13 = arith.divf %11, %12 : vector<16x1xf32>
    %cst_6 = arith.constant 9.99999974E-6 : f32
    %14 = vector.broadcast %cst_6 : f32 to vector<16x1xf32>
    %15 = arith.addf %13, %14 : vector<16x1xf32>
    %16 = math.rsqrt %15 : vector<16x1xf32>
    %17 = vector.broadcast %16 : vector<16x1xf32> to vector<16x128xf32>
    %18 = arith.mulf %8, %17 : vector<16x128xf32>
    %c0_7 = arith.constant 0 : index
    %c0_8 = arith.constant 0 : index
    %19 = vector.load %arg3[%c0_7, %c0_8] : memref<1x128xf32, #tpu.memory_space<vmem>>, vector<1x128xf32>
    %20 = vector.broadcast %19 : vector<1x128xf32> to vector<16x128xf32>
    %21 = arith.mulf %18, %20 : vector<16x128xf32>
    %c0_9 = arith.constant 0 : index
    %c0_10 = arith.constant 0 : index
    %22 = vector.load %arg4[%c0_9, %c0_10] : memref<1x128xf32, #tpu.memory_space<vmem>>, vector<1x128xf32>
    %23 = vector.broadcast %22 : vector<1x128xf32> to vector<16x128xf32>
    %24 = arith.addf %21, %23 : vector<16x128xf32>
    %25 = arith.truncf %24 : vector<16x128xf32> to vector<16x128xbf16>
    %c0_11 = arith.constant 0 : index
    %c0_12 = arith.constant 0 : index
    %26 = vector.load %arg7[%c0_11, %c0_12] : memref<128x160xbf16, #tpu.memory_space<vmem>>, vector<128x160xbf16>
    %cst_13 = arith.constant dense<0.000000e+00> : vector<16x160xf32>
    %27 = tpu.matmul %25, %26, %cst_13 {dimension_numbers = #tpu.dot_dimension_numbers<[1], [0], [0], [1], [0, 0, 1, 1], [], []>} : vector<16x128xbf16>, vector<128x160xbf16>, vector<16x160xf32> -> vector<16x160xf32>
    %c0_14 = arith.constant 0 : index
    %c0_15 = arith.constant 0 : index
    %28 = vector.load %arg8[%c0_14, %c0_15] : memref<1x160xf32, #tpu.memory_space<vmem>>, vector<1x160xf32>
    %29 = vector.broadcast %28 : vector<1x160xf32> to vector<16x160xf32>
    %30 = arith.addf %27, %29 : vector<16x160xf32>
    %31 = vector.extract_strided_slice %30 {offsets = [0, 0], sizes = [16, 128], strides = [1, 1]} : vector<16x160xf32> to vector<16x128xf32>
    %32 = vector.extract_strided_slice %30 {offsets = [0, 128], sizes = [16, 16], strides = [1, 1]} : vector<16x160xf32> to vector<16x16xf32>
    %33 = arith.truncf %32 : vector<16x16xf32> to vector<16x16xbf16>
    %34 = vector.extract_strided_slice %30 {offsets = [0, 144], sizes = [16, 16], strides = [1, 1]} : vector<16x160xf32> to vector<16x16xf32>
    %35 = arith.truncf %34 : vector<16x16xf32> to vector<16x16xbf16>
    %36 = vector.extract_strided_slice %31 {offsets = [0, 0], sizes = [16, 16], strides = [1, 1]} : vector<16x128xf32> to vector<16x16xf32>
    %37 = arith.truncf %36 : vector<16x16xf32> to vector<16x16xbf16>
    %c0_16 = arith.constant 0 : index
    %c0_17 = arith.constant 0 : index
    %38 = vector.load %arg17[%c0_16, %c0_17] : memref<128x16xbf16, #tpu.memory_space<vmem>>, vector<16x16xbf16>
    tpu.vector_store %arg17[%c0_16, %c0_17], %37 {strides = array<i32>} : memref<128x16xbf16, #tpu.memory_space<vmem>>, vector<16x16xbf16>,
    %39 = vector.extract_strided_slice %31 {offsets = [0, 16], sizes = [16, 16], strides = [1, 1]} : vector<16x128xf32> to vector<16x16xf32>
    %40 = arith.truncf %39 : vector<16x16xf32> to vector<16x16xbf16>
    %c16 = arith.constant 16 : index
    %c0_18 = arith.constant 0 : index
    %41 = vector.load %arg17[%c16, %c0_18] : memref<128x16xbf16, #tpu.memory_space<vmem>>, vector<16x16xbf16>
    tpu.vector_store %arg17[%c16, %c0_18], %40 {strides = array<i32>} : memref<128x16xbf16, #tpu.memory_space<vmem>>, vector<16x16xbf16>,
    %42 = vector.extract_strided_slice %31 {offsets = [0, 32], sizes = [16, 16], strides = [1, 1]} : vector<16x128xf32> to vector<16x16xf32>
    %43 = arith.truncf %42 : vector<16x16xf32> to vector<16x16xbf16>
    %c32 = arith.constant 32 : index
    %c0_19 = arith.constant 0 : index
    %44 = vector.load %arg17[%c32, %c0_19] : memref<128x16xbf16, #tpu.memory_space<vmem>>, vector<16x16xbf16>
    tpu.vector_store %arg17[%c32, %c0_19], %43 {strides = array<i32>} : memref<128x16xbf16, #tpu.memory_space<vmem>>, vector<16x16xbf16>,
    %45 = vector.extract_strided_slice %31 {offsets = [0, 48], sizes = [16, 16], strides = [1, 1]} : vector<16x128xf32> to vector<16x16xf32>
    %46 = arith.truncf %45 : vector<16x16xf32> to vector<16x16xbf16>
    %c48 = arith.constant 48 : index
    %c0_20 = arith.constant 0 : index
    %47 = vector.load %arg17[%c48, %c0_20] : memref<128x16xbf16, #tpu.memory_space<vmem>>, vector<16x16xbf16>
    tpu.vector_store %arg17[%c48, %c0_20], %46 {strides = array<i32>} : memref<128x16xbf16, #tpu.memory_space<vmem>>, vector<16x16xbf16>,
    %48 = vector.extract_strided_slice %31 {offsets = [0, 64], sizes = [16, 16], strides = [1, 1]} : vector<16x128xf32> to vector<16x16xf32>
    %49 = arith.truncf %48 : vector<16x16xf32> to vector<16x16xbf16>
    %c64 = arith.constant 64 : index
    %c0_21 = arith.constant 0 : index
    %50 = vector.load %arg17[%c64, %c0_21] : memref<128x16xbf16, #tpu.memory_space<vmem>>, vector<16x16xbf16>
    tpu.vector_store %arg17[%c64, %c0_21], %49 {strides = array<i32>} : memref<128x16xbf16, #tpu.memory_space<vmem>>, vector<16x16xbf16>,
    %51 = vector.extract_strided_slice %31 {offsets = [0, 80], sizes = [16, 16], strides = [1, 1]} : vector<16x128xf32> to vector<16x16xf32>
    %52 = arith.truncf %51 : vector<16x16xf32> to vector<16x16xbf16>
    %c80 = arith.constant 80 : index
    %c0_22 = arith.constant 0 : index
    %53 = vector.load %arg17[%c80, %c0_22] : memref<128x16xbf16, #tpu.memory_space<vmem>>, vector<16x16xbf16>
    tpu.vector_store %arg17[%c80, %c0_22], %52 {strides = array<i32>} : memref<128x16xbf16, #tpu.memory_space<vmem>>, vector<16x16xbf16>,
    %54 = vector.extract_strided_slice %31 {offsets = [0, 96], sizes = [16, 16], strides = [1, 1]} : vector<16x128xf32> to vector<16x16xf32>
    %55 = arith.truncf %54 : vector<16x16xf32> to vector<16x16xbf16>
    %c96 = arith.constant 96 : index
    %c0_23 = arith.constant 0 : index
    %56 = vector.load %arg17[%c96, %c0_23] : memref<128x16xbf16, #tpu.memory_space<vmem>>, vector<16x16xbf16>
    tpu.vector_store %arg17[%c96, %c0_23], %55 {strides = array<i32>} : memref<128x16xbf16, #tpu.memory_space<vmem>>, vector<16x16xbf16>,
    %57 = vector.extract_strided_slice %31 {offsets = [0, 112], sizes = [16, 16], strides = [1, 1]} : vector<16x128xf32> to vector<16x16xf32>
    %58 = arith.truncf %57 : vector<16x16xf32> to vector<16x16xbf16>
    %c112 = arith.constant 112 : index
    %c0_24 = arith.constant 0 : index
    %59 = vector.load %arg17[%c112, %c0_24] : memref<128x16xbf16, #tpu.memory_space<vmem>>, vector<16x16xbf16>
    tpu.vector_store %arg17[%c112, %c0_24], %58 {strides = array<i32>} : memref<128x16xbf16, #tpu.memory_space<vmem>>, vector<16x16xbf16>,
    %c0_25 = arith.constant 0 : index
    %c0_26 = arith.constant 0 : index
    %60 = vector.load %arg17[%c0_25, %c0_26] : memref<128x16xbf16, #tpu.memory_space<vmem>>, vector<128x16xbf16>
    %cst_27 = arith.constant dense<0.000000e+00> : vector<128x16xf32>
    %61 = tpu.matmul %60, %33, %cst_27 {dimension_numbers = #tpu.dot_dimension_numbers<[1], [1], [0], [0], [0, 0, 1, 0], [], []>} : vector<128x16xbf16>, vector<16x16xbf16>, vector<128x16xf32> -> vector<128x16xf32>
    %62 = tpu.iota {dimensions = array<i32: 0>} : vector<128x16xi32>
    %63 = tpu.iota {dimensions = array<i32: 1>} : vector<128x16xi32>
    %c15_i32 = arith.constant 15 : i32
    %64 = vector.broadcast %c15_i32 : i32 to vector<128x16xi32>
    %65 = arith.andi %62, %64 : vector<128x16xi32>
    %66 = arith.cmpi sle, %63, %65 : vector<128x16xi32>
    %cst_28 = arith.constant -1.000000e+30 : f32
    %67 = vector.broadcast %cst_28 : f32 to vector<128x16xf32>
    %68 = arith.select %66, %61, %67 : vector<128x16xi1>, vector<128x16xf32>
    %cst_29 = arith.constant dense<0xFF800000> : vector<128xf32>
    %69 = vector.multi_reduction <maximumf>, %68, %cst_29 [1] : vector<128x16xf32> to vector<128xf32>
    %70 = vector.shape_cast %69 : vector<128xf32> to vector<128x1xf32>
    %71 = vector.broadcast %70 : vector<128x1xf32> to vector<128x16xf32>
    %72 = arith.subf %68, %71 : vector<128x16xf32>
    %73 = math.exp %72 : vector<128x16xf32>
    %cst_30 = arith.constant dense<0.000000e+00> : vector<128xf32>
    %74 = vector.multi_reduction <add>, %73, %cst_30 [1] : vector<128x16xf32> to vector<128xf32>
    %75 = vector.shape_cast %74 : vector<128xf32> to vector<128x1xf32>
    %76 = arith.truncf %73 : vector<128x16xf32> to vector<128x16xbf16>
    %cst_31 = arith.constant dense<0.000000e+00> : vector<128x16xf32>
    %77 = tpu.matmul %76, %35, %cst_31 {dimension_numbers = #tpu.dot_dimension_numbers<[1], [0], [0], [1], [0, 0, 1, 1], [], []>} : vector<128x16xbf16>, vector<16x16xbf16>, vector<128x16xf32> -> vector<128x16xf32>
    %78 = tpu.reciprocal %75 : vector<128x1xf32> -> vector<128x1xf32>
    %79 = vector.broadcast %78 : vector<128x1xf32> to vector<128x16xf32>
    %80 = arith.mulf %77, %79 : vector<128x16xf32>
    %81 = vector.extract_strided_slice %80 {offsets = [0, 0], sizes = [16, 16], strides = [1, 1]} : vector<128x16xf32> to vector<16x16xf32>
    %82 = arith.truncf %81 : vector<16x16xf32> to vector<16x16xbf16>
    %c0_32 = arith.constant 0 : index
    %c0_33 = arith.constant 0 : index
    %83 = vector.load %arg18[%c0_32, %c0_33] : memref<16x128xbf16, #tpu.memory_space<vmem>>, vector<16x16xbf16>
    tpu.vector_store %arg18[%c0_32, %c0_33], %82 {strides = array<i32>} : memref<16x128xbf16, #tpu.memory_space<vmem>>, vector<16x16xbf16>,
    %84 = vector.extract_strided_slice %80 {offsets = [16, 0], sizes = [16, 16], strides = [1, 1]} : vector<128x16xf32> to vector<16x16xf32>
    %85 = arith.truncf %84 : vector<16x16xf32> to vector<16x16xbf16>
    %c0_34 = arith.constant 0 : index
    %c16_35 = arith.constant 16 : index
    %86 = vector.load %arg18[%c0_34, %c16_35] : memref<16x128xbf16, #tpu.memory_space<vmem>>, vector<16x16xbf16>
    tpu.vector_store %arg18[%c0_34, %c16_35], %85 {strides = array<i32>} : memref<16x128xbf16, #tpu.memory_space<vmem>>, vector<16x16xbf16>,
    %87 = vector.extract_strided_slice %80 {offsets = [32, 0], sizes = [16, 16], strides = [1, 1]} : vector<128x16xf32> to vector<16x16xf32>
    %88 = arith.truncf %87 : vector<16x16xf32> to vector<16x16xbf16>
    %c0_36 = arith.constant 0 : index
    %c32_37 = arith.constant 32 : index
    %89 = vector.load %arg18[%c0_36, %c32_37] : memref<16x128xbf16, #tpu.memory_space<vmem>>, vector<16x16xbf16>
    tpu.vector_store %arg18[%c0_36, %c32_37], %88 {strides = array<i32>} : memref<16x128xbf16, #tpu.memory_space<vmem>>, vector<16x16xbf16>,
    %90 = vector.extract_strided_slice %80 {offsets = [48, 0], sizes = [16, 16], strides = [1, 1]} : vector<128x16xf32> to vector<16x16xf32>
    %91 = arith.truncf %90 : vector<16x16xf32> to vector<16x16xbf16>
    %c0_38 = arith.constant 0 : index
    %c48_39 = arith.constant 48 : index
    %92 = vector.load %arg18[%c0_38, %c48_39] : memref<16x128xbf16, #tpu.memory_space<vmem>>, vector<16x16xbf16>
    tpu.vector_store %arg18[%c0_38, %c48_39], %91 {strides = array<i32>} : memref<16x128xbf16, #tpu.memory_space<vmem>>, vector<16x16xbf16>,
    %93 = vector.extract_strided_slice %80 {offsets = [64, 0], sizes = [16, 16], strides = [1, 1]} : vector<128x16xf32> to vector<16x16xf32>
    %94 = arith.truncf %93 : vector<16x16xf32> to vector<16x16xbf16>
    %c0_40 = arith.constant 0 : index
    %c64_41 = arith.constant 64 : index
    %95 = vector.load %arg18[%c0_40, %c64_41] : memref<16x128xbf16, #tpu.memory_space<vmem>>, vector<16x16xbf16>
    tpu.vector_store %arg18[%c0_40, %c64_41], %94 {strides = array<i32>} : memref<16x128xbf16, #tpu.memory_space<vmem>>, vector<16x16xbf16>,
    %96 = vector.extract_strided_slice %80 {offsets = [80, 0], sizes = [16, 16], strides = [1, 1]} : vector<128x16xf32> to vector<16x16xf32>
    %97 = arith.truncf %96 : vector<16x16xf32> to vector<16x16xbf16>
    %c0_42 = arith.constant 0 : index
    %c80_43 = arith.constant 80 : index
    %98 = vector.load %arg18[%c0_42, %c80_43] : memref<16x128xbf16, #tpu.memory_space<vmem>>, vector<16x16xbf16>
    tpu.vector_store %arg18[%c0_42, %c80_43], %97 {strides = array<i32>} : memref<16x128xbf16, #tpu.memory_space<vmem>>, vector<16x16xbf16>,
    %99 = vector.extract_strided_slice %80 {offsets = [96, 0], sizes = [16, 16], strides = [1, 1]} : vector<128x16xf32> to vector<16x16xf32>
    %100 = arith.truncf %99 : vector<16x16xf32> to vector<16x16xbf16>
    %c0_44 = arith.constant 0 : index
    %c96_45 = arith.constant 96 : index
    %101 = vector.load %arg18[%c0_44, %c96_45] : memref<16x128xbf16, #tpu.memory_space<vmem>>, vector<16x16xbf16>
    tpu.vector_store %arg18[%c0_44, %c96_45], %100 {strides = array<i32>} : memref<16x128xbf16, #tpu.memory_space<vmem>>, vector<16x16xbf16>,
    %102 = vector.extract_strided_slice %80 {offsets = [112, 0], sizes = [16, 16], strides = [1, 1]} : vector<128x16xf32> to vector<16x16xf32>
    %103 = arith.truncf %102 : vector<16x16xf32> to vector<16x16xbf16>
    %c0_46 = arith.constant 0 : index
    %c112_47 = arith.constant 112 : index
    %104 = vector.load %arg18[%c0_46, %c112_47] : memref<16x128xbf16, #tpu.memory_space<vmem>>, vector<16x16xbf16>
    tpu.vector_store %arg18[%c0_46, %c112_47], %103 {strides = array<i32>} : memref<16x128xbf16, #tpu.memory_space<vmem>>, vector<16x16xbf16>,
    %c0_48 = arith.constant 0 : index
    %c0_49 = arith.constant 0 : index
    %105 = vector.load %arg18[%c0_48, %c0_49] : memref<16x128xbf16, #tpu.memory_space<vmem>>, vector<16x128xbf16>
    %c0_50 = arith.constant 0 : index
    %c0_51 = arith.constant 0 : index
    %106 = vector.load %arg9[%c0_50, %c0_51] : memref<128x128xbf16, #tpu.memory_space<vmem>>, vector<128x128xbf16>
    %cst_52 = arith.constant dense<0.000000e+00> : vector<16x128xf32>
    %107 = tpu.matmul %105, %106, %cst_52 {dimension_numbers = #tpu.dot_dimension_numbers<[1], [0], [0], [1], [0, 0, 1, 1], [], []>} : vector<16x128xbf16>, vector<128x128xbf16>, vector<16x128xf32> -> vector<16x128xf32>
    %c0_53 = arith.constant 0 : index
    %c0_54 = arith.constant 0 : index
    %108 = vector.load %arg10[%c0_53, %c0_54] : memref<1x128xf32, #tpu.memory_space<vmem>>, vector<1x128xf32>
    %109 = vector.broadcast %108 : vector<1x128xf32> to vector<16x128xf32>
    %110 = arith.addf %107, %109 : vector<16x128xf32>
    %111 = arith.addf %110, %2 : vector<16x128xf32>
    %c0_55 = arith.constant 0 : index
    %c0_56 = arith.constant 0 : index
    %112 = vector.load %arg16[%c0_55, %c0_56] : memref<16x128xf32, #tpu.memory_space<vmem>>, vector<16x128xf32>
    tpu.vector_store %arg16[%c0_55, %c0_56], %111 {strides = array<i32>} : memref<16x128xf32, #tpu.memory_space<vmem>>, vector<16x128xf32>,
    %cst_57 = arith.constant dense<0.000000e+00> : vector<16xf32>
    %113 = vector.multi_reduction <add>, %111, %cst_57 [1] : vector<16x128xf32> to vector<16xf32>
    %114 = vector.shape_cast %113 : vector<16xf32> to vector<16x1xf32>
    %cst_58 = arith.constant 1.280000e+02 : f32
    %115 = vector.broadcast %cst_58 : f32 to vector<16x1xf32>
    %116 = arith.divf %114, %115 : vector<16x1xf32>
    %117 = vector.broadcast %116 : vector<16x1xf32> to vector<16x128xf32>
    %118 = arith.subf %111, %117 : vector<16x128xf32>
    %119 = arith.mulf %118, %118 : vector<16x128xf32>
    %cst_59 = arith.constant dense<0.000000e+00> : vector<16xf32>
    %120 = vector.multi_reduction <add>, %119, %cst_59 [1] : vector<16x128xf32> to vector<16xf32>
    %121 = vector.shape_cast %120 : vector<16xf32> to vector<16x1xf32>
    %cst_60 = arith.constant 1.280000e+02 : f32
    %122 = vector.broadcast %cst_60 : f32 to vector<16x1xf32>
    %123 = arith.divf %121, %122 : vector<16x1xf32>
    %cst_61 = arith.constant 9.99999974E-6 : f32
    %124 = vector.broadcast %cst_61 : f32 to vector<16x1xf32>
    %125 = arith.addf %123, %124 : vector<16x1xf32>
    %126 = math.rsqrt %125 : vector<16x1xf32>
    %127 = vector.broadcast %126 : vector<16x1xf32> to vector<16x128xf32>
    %128 = arith.mulf %118, %127 : vector<16x128xf32>
    %c0_62 = arith.constant 0 : index
    %c0_63 = arith.constant 0 : index
    %129 = vector.load %arg5[%c0_62, %c0_63] : memref<1x128xf32, #tpu.memory_space<vmem>>, vector<1x128xf32>
    %130 = vector.broadcast %129 : vector<1x128xf32> to vector<16x128xf32>
    %131 = arith.mulf %128, %130 : vector<16x128xf32>
    %c0_64 = arith.constant 0 : index
    %c0_65 = arith.constant 0 : index
    %132 = vector.load %arg6[%c0_64, %c0_65] : memref<1x128xf32, #tpu.memory_space<vmem>>, vector<1x128xf32>
    %133 = vector.broadcast %132 : vector<1x128xf32> to vector<16x128xf32>
    %134 = arith.addf %131, %133 : vector<16x128xf32>
    %135 = arith.truncf %134 : vector<16x128xf32> to vector<16x128xbf16>
    %c0_66 = arith.constant 0 : index
    %c0_67 = arith.constant 0 : index
    %136 = vector.load %arg11[%c0_66, %c0_67] : memref<128x512xbf16, #tpu.memory_space<vmem>>, vector<128x512xbf16>
    %cst_68 = arith.constant dense<0.000000e+00> : vector<16x512xf32>
    %137 = tpu.matmul %135, %136, %cst_68 {dimension_numbers = #tpu.dot_dimension_numbers<[1], [0], [0], [1], [0, 0, 1, 1], [], []>} : vector<16x128xbf16>, vector<128x512xbf16>, vector<16x512xf32> -> vector<16x512xf32>
    %c0_69 = arith.constant 0 : index
    %c0_70 = arith.constant 0 : index
    %138 = vector.load %arg12[%c0_69, %c0_70] : memref<1x512xf32, #tpu.memory_space<vmem>>, vector<1x512xf32>
    %139 = vector.broadcast %138 : vector<1x512xf32> to vector<16x512xf32>
    %140 = arith.addf %137, %139 : vector<16x512xf32>
    %cst_71 = arith.constant 5.000000e-01 : f32
    %141 = vector.broadcast %cst_71 : f32 to vector<16x512xf32>
    %142 = arith.mulf %141, %140 : vector<16x512xf32>
    %cst_72 = arith.constant 4.471500e-02 : f32
    %143 = vector.broadcast %cst_72 : f32 to vector<16x512xf32>
    %144 = arith.mulf %143, %140 : vector<16x512xf32>
    %145 = arith.mulf %144, %140 : vector<16x512xf32>
    %146 = arith.mulf %145, %140 : vector<16x512xf32>
    %147 = arith.addf %140, %146 : vector<16x512xf32>
    %cst_73 = arith.constant 0.797884583 : f32
    %148 = vector.broadcast %cst_73 : f32 to vector<16x512xf32>
    %149 = arith.mulf %148, %147 : vector<16x512xf32>
    %150 = math.tanh %149 : vector<16x512xf32>
    %cst_74 = arith.constant 1.000000e+00 : f32
    %151 = vector.broadcast %cst_74 : f32 to vector<16x512xf32>
    %152 = arith.addf %151, %150 : vector<16x512xf32>
    %153 = arith.mulf %142, %152 : vector<16x512xf32>
    %154 = arith.truncf %153 : vector<16x512xf32> to vector<16x512xbf16>
    %c0_75 = arith.constant 0 : index
    %c0_76 = arith.constant 0 : index
    %155 = vector.load %arg13[%c0_75, %c0_76] : memref<512x128xbf16, #tpu.memory_space<vmem>>, vector<512x128xbf16>
    %cst_77 = arith.constant dense<0.000000e+00> : vector<16x128xf32>
    %156 = tpu.matmul %154, %155, %cst_77 {dimension_numbers = #tpu.dot_dimension_numbers<[1], [0], [0], [1], [0, 0, 1, 1], [], []>} : vector<16x512xbf16>, vector<512x128xbf16>, vector<16x128xf32> -> vector<16x128xf32>
    %c0_78 = arith.constant 0 : index
    %c0_79 = arith.constant 0 : index
    %157 = vector.load %arg14[%c0_78, %c0_79] : memref<1x128xf32, #tpu.memory_space<vmem>>, vector<1x128xf32>
    %158 = vector.broadcast %157 : vector<1x128xf32> to vector<16x128xf32>
    %159 = arith.addf %156, %158 : vector<16x128xf32>
    %c0_80 = arith.constant 0 : index
    %c0_81 = arith.constant 0 : index
    %160 = vector.load %arg15[%c0_80, %c0_81] : memref<16x128xf32, #tpu.memory_space<vmem>>, vector<16x128xf32>
    tpu.vector_store %arg15[%c0_80, %c0_81], %159 {strides = array<i32>} : memref<16x128xf32, #tpu.memory_space<vmem>>, vector<16x128xf32>,
    return
  }
  func.func @transform_0(%arg0: i32) -> (i32, i32) {
    %c0_i32 = arith.constant 0 : i32
    %c0_i32_0 = arith.constant 0 : i32
    %c0_i32_1 = arith.constant 0 : i32
    return %c0_i32, %c0_i32_0 : i32, i32
  }
  func.func @transform_1(%arg0: i32) -> (i32, i32) {
    %c0_i32 = arith.constant 0 : i32
    %c0_i32_0 = arith.constant 0 : i32
    %c0_i32_1 = arith.constant 0 : i32
    return %c0_i32, %c0_i32_0 : i32, i32
  }
  func.func @transform_2(%arg0: i32) -> (i32, i32) {
    %c0_i32 = arith.constant 0 : i32
    %c0_i32_0 = arith.constant 0 : i32
    %c0_i32_1 = arith.constant 0 : i32
    return %c0_i32, %c0_i32_0 : i32, i32
  }
  func.func @transform_3(%arg0: i32) -> (i32, i32) {
    %c0_i32 = arith.constant 0 : i32
    %c0_i32_0 = arith.constant 0 : i32
    %c0_i32_1 = arith.constant 0 : i32
    return %c0_i32, %c0_i32_0 : i32, i32
  }
  func.func @transform_4(%arg0: i32) -> (i32, i32) {
    %c0_i32 = arith.constant 0 : i32
    %c0_i32_0 = arith.constant 0 : i32
    %c0_i32_1 = arith.constant 0 : i32
    return %c0_i32, %c0_i32_0 : i32, i32
  }
  func.func @transform_5(%arg0: i32) -> (i32, i32) {
    %c0_i32 = arith.constant 0 : i32
    %c0_i32_0 = arith.constant 0 : i32
    %c0_i32_1 = arith.constant 0 : i32
    return %c0_i32, %c0_i32_0 : i32, i32
  }
  func.func @transform_6(%arg0: i32) -> (i32, i32) {
    %c0_i32 = arith.constant 0 : i32
    %c0_i32_0 = arith.constant 0 : i32
    %c0_i32_1 = arith.constant 0 : i32
    return %c0_i32, %c0_i32_0 : i32, i32
  }
  func.func @transform_7(%arg0: i32) -> (i32, i32) {
    %c0_i32 = arith.constant 0 : i32
    %c0_i32_0 = arith.constant 0 : i32
    %c0_i32_1 = arith.constant 0 : i32
    return %c0_i32, %c0_i32_0 : i32, i32
  }
  func.func @transform_8(%arg0: i32) -> (i32, i32) {
    %c0_i32 = arith.constant 0 : i32
    %c0_i32_0 = arith.constant 0 : i32
    %c0_i32_1 = arith.constant 0 : i32
    return %c0_i32, %c0_i32_0 : i32, i32
  }
  func.func @transform_9(%arg0: i32) -> (i32, i32) {
    %c0_i32 = arith.constant 0 : i32
    %c0_i32_0 = arith.constant 0 : i32
    %c0_i32_1 = arith.constant 0 : i32
    return %c0_i32, %c0_i32_0 : i32, i32
  }
  func.func @transform_10(%arg0: i32) -> (i32, i32) {
    %c0_i32 = arith.constant 0 : i32
    %c0_i32_0 = arith.constant 0 : i32
    %c0_i32_1 = arith.constant 0 : i32
    return %c0_i32, %c0_i32_0 : i32, i32
  }
  func.func @transform_11(%arg0: i32) -> (i32, i32) {
    %c0_i32 = arith.constant 0 : i32
    %c0_i32_0 = arith.constant 0 : i32
    %c0_i32_1 = arith.constant 0 : i32
    return %c0_i32, %c0_i32_0 : i32, i32
  }
  func.func @transform_12(%arg0: i32) -> (i32, i32) {
    %c0_i32 = arith.constant 0 : i32
    %c0_i32_0 = arith.constant 0 : i32
    %c0_i32_1 = arith.constant 0 : i32
    return %c0_i32, %c0_i32_0 : i32, i32
  }
  func.func @transform_13(%arg0: i32) -> (i32, i32) {
    %c0_i32 = arith.constant 0 : i32
    %c0_i32_0 = arith.constant 0 : i32
    %c0_i32_1 = arith.constant 0 : i32
    return %c0_i32, %c0_i32_0 : i32, i32
  }
  func.func @transform_14(%arg0: i32) -> (i32, i32) {
    %c0_i32 = arith.constant 0 : i32
    %c0_i32_0 = arith.constant 0 : i32
    %c0_i32_1 = arith.constant 0 : i32
    return %c0_i32, %c0_i32_0 : i32, i32
  }
  func.func @transform_15(%arg0: i32) -> (i32, i32) {
    %c0_i32 = arith.constant 0 : i32
    %c0_i32_0 = arith.constant 0 : i32
    %c0_i32_1 = arith.constant 0 : i32
    return %c0_i32, %c0_i32_0 : i32, i32
  }
}

</mosaic_0001>

<llo_original>
// kernel: tpu_custom_call.1
$region0: #{tpu_custom_call.1}
  #allocation0 [shape = 'u32[]', space=smem, size = 0x4, offset = 0x4, fixed_abs, tag = 'smem constant byte address 0x4 - core index']
  #allocation1 [shape = 'u32[72,128]{1,0:T(1,128)}', space=vmem, size = 0x9000, scoped, tag = 'internal scratch']
  #allocation2 [shape = 'bf16[128,16]{1,0:T(8,128)(2,1)}', space=vmem, size = 0x8000, scoped, tag = 'scratch operand']
  #allocation3 [shape = 'bf16[16,128]{1,0:T(8,128)(2,1)}', space=vmem, size = 0x1000, scoped, tag = 'scratch operand']
  %s0 = inlined_call_operand.vmem [shape: f32[16,128], index: 0, kind: input, shape index: {}]
  %s1 = inlined_call_operand.vmem [shape: f32[16,128], index: 1, kind: input, shape index: {}]
  %s2 = inlined_call_operand.vmem [shape: f32[1,128], index: 2, kind: input, shape index: {}]
  %s3 = inlined_call_operand.vmem [shape: f32[1,128], index: 3, kind: input, shape index: {}]
  %s4 = inlined_call_operand.vmem [shape: f32[1,128], index: 4, kind: input, shape index: {}]
  %s5 = inlined_call_operand.vmem [shape: f32[1,128], index: 5, kind: input, shape index: {}]
  %s6 = inlined_call_operand.vmem [shape: bf16[128,160], index: 6, kind: input, shape index: {}]
  %s7 = inlined_call_operand.vmem [shape: f32[1,160], index: 7, kind: input, shape index: {}]
  %s8 = inlined_call_operand.vmem [shape: bf16[128,128], index: 8, kind: input, shape index: {}]
  %s9 = inlined_call_operand.vmem [shape: f32[1,128], index: 9, kind: input, shape index: {}]
  %s10 = inlined_call_operand.hbm [shape: bf16[128,512], index: 10, kind: input, shape index: {}]
  %s11 = inlined_call_operand.vmem [shape: f32[1,512], index: 11, kind: input, shape index: {}]
  %s12 = inlined_call_operand.hbm [shape: bf16[512,128], index: 12, kind: input, shape index: {}]
  %s13 = inlined_call_operand.vmem [shape: f32[1,128], index: 13, kind: input, shape index: {}]
  %s14 = inlined_call_operand.hbm [shape: f32[16,128], index: 14, kind: output, shape index: {0}]
  %s15 = inlined_call_operand.hbm [shape: f32[16,128], index: 15, kind: output, shape index: {1}]
  %16 = xla_tuple %s14, %s15
  %s17 = sld [smem:[#allocation0]]
  $region82: #{tpu_custom_call.1} parent=0
    _
  %s19 = ssub.s32 1, %s17
  %s20 = scalar_select 0, %s19, %s17
  $region1: #{tpu_custom_call.1} parent=0
    #allocation4 [shape = 'u8[131072]{0}', space=vmem, size = 0x20000, scoped, tag = 'input window, operand 10, single buffered']
    #allocation5 [shape = 's32[1]{0}', space=sflag, size = 0x4, scoped, tag = 'scoped memory for tpu_custom_call.1']
    #allocation6 [shape = 's32[1]{0}', space=sflag, size = 0x4, scoped, tag = 'scoped memory for tpu_custom_call.1']
    #allocation7 [shape = 'u8[131072]{0}', space=vmem, size = 0x20000, scoped, tag = 'input window, operand 12, single buffered']
    #allocation8 [shape = 's32[1]{0}', space=sflag, size = 0x4, scoped, tag = 'scoped memory for tpu_custom_call.1']
    #allocation9 [shape = 'u8[8192]{0}', space=vmem, size = 0x2000, scoped, tag = 'output window, operand 0, single buffered']
    #allocation10 [shape = 'u8[8192]{0}', space=vmem, size = 0x2000, scoped, tag = 'output window, operand 1, single buffered']
    #allocation11 [shape = 's32[1]{0}', space=sflag, size = 0x4, scoped, tag = 'scoped memory for tpu_custom_call.1']
    %21 = vsyncpa [#allocation5], 0
    %22 = vsyncpa [#allocation8], 0
    %23 = vsyncpa [#allocation6], 0
    %24 = vsyncpa [#allocation11], 0
    // Predicated region
    $region2: #{tpu_custom_call.1} parent=1 // pred_check
      _
    $region3: #{tpu_custom_call.1} parent=1 // pred_check_branch
      %26 = sbr.rel (0) target = $region5
    $region4: #{tpu_custom_call.1} parent=1 // pred_region
      _
    $region5: #{tpu_custom_call.1} parent=1 // pred_fallthru
      _
    // Predicated region
    $region6: #{tpu_custom_call.1} parent=1 // pred_check
      _
    $region7: #{tpu_custom_call.1} parent=1 // pred_check_branch
      %28 = sbr.rel (0) target = $region9
    $region8: #{tpu_custom_call.1} parent=1 // pred_region
      _
    $region9: #{tpu_custom_call.1} parent=1 // pred_fallthru
      _
    // Predicated region
    $region10: #{tpu_custom_call.1} parent=1 // pred_check
      _
    $region11: #{tpu_custom_call.1} parent=1 // pred_check_branch
      %30 = sbr.rel (0) target = $region13
    $region12: #{tpu_custom_call.1} parent=1 // pred_region
      _
    $region13: #{tpu_custom_call.1} parent=1 // pred_fallthru
      _
    // Predicated region
    $region14: #{tpu_custom_call.1} parent=1 // pred_check
      _
    $region15: #{tpu_custom_call.1} parent=1 // pred_check_branch
      %32 = sbr.rel (0) target = $region17
    $region16: #{tpu_custom_call.1} parent=1 // pred_region
      _
    $region17: #{tpu_custom_call.1} parent=1 // pred_fallthru
      _
    // Predicated region
    $region18: #{tpu_custom_call.1} parent=1 // pred_check
      _
    $region19: #{tpu_custom_call.1} parent=1 // pred_check_branch
      %34 = sbr.rel (0) target = $region21
    $region20: #{tpu_custom_call.1} parent=1 // pred_region
      _
    $region21: #{tpu_custom_call.1} parent=1 // pred_fallthru
      _
    // Predicated region
    $region22: #{tpu_custom_call.1} parent=1 // pred_check
      _
    $region23: #{tpu_custom_call.1} parent=1 // pred_check_branch
      %36 = sbr.rel (0) target = $region25
    $region24: #{tpu_custom_call.1} parent=1 // pred_region
      _
    $region25: #{tpu_custom_call.1} parent=1 // pred_fallthru
      _
    // Predicated region
    $region26: #{tpu_custom_call.1} parent=1 // pred_check
      _
    $region27: #{tpu_custom_call.1} parent=1 // pred_check_branch
      %38 = sbr.rel (0) target = $region29
    $region28: #{tpu_custom_call.1} parent=1 // pred_region
      _
    $region29: #{tpu_custom_call.1} parent=1 // pred_fallthru
      _
    // Predicated region
    $region30: #{tpu_custom_call.1} parent=1 // pred_check
      _
    $region31: #{tpu_custom_call.1} parent=1 // pred_check_branch
      %40 = sbr.rel (0) target = $region33
    $region32: #{tpu_custom_call.1} parent=1 // pred_region
      _
    $region33: #{tpu_custom_call.1} parent=1 // pred_fallthru
      _
    // Predicated region
    $region34: #{tpu_custom_call.1} parent=1 // pred_check
      _
    $region35: #{tpu_custom_call.1} parent=1 // pred_check_branch
      %42 = sbr.rel (0) target = $region37
    $region36: #{tpu_custom_call.1} parent=1 // pred_region
      _
    $region37: #{tpu_custom_call.1} parent=1 // pred_fallthru
      _
    // Predicated region
    $region38: #{tpu_custom_call.1} parent=1 // pred_check
      _
    $region39: #{tpu_custom_call.1} parent=1 // pred_check_branch
      %44 = sbr.rel (0) target = $region41
    $region40: #{tpu_custom_call.1} parent=1 // pred_region
      _
    $region41: #{tpu_custom_call.1} parent=1 // pred_fallthru
      _
    // Predicated region
    $region42: #{tpu_custom_call.1} parent=1 // pred_check
      _
    $region43: #{tpu_custom_call.1} parent=1 // pred_check_branch
      %46 = sbr.rel (0) target = $region45
    $region44: #{tpu_custom_call.1} parent=1 // pred_region
      %48 = vsyncadd [#allocation5], 0
      %s49 = sshll.u32 %s10, 4
      %s50 = int_to_ptr.hbm [resolvable:$true] %s49
      %s51 = sshll.u32 [#allocation4], 4
      %s52 = int_to_ptr.vmem [resolvable:$true] %s51
      %57 = dma.hbm_to_vmem [thread:$0]  %s50, 4096, %s52, [#allocation5], 256, 256, 16
    $region45: #{tpu_custom_call.1} parent=1 // pred_fallthru
      _
    // Predicated region
    $region46: #{tpu_custom_call.1} parent=1 // pred_check
      _
    $region47: #{tpu_custom_call.1} parent=1 // pred_check_branch
      %59 = sbr.rel (0) target = $region49
    $region48: #{tpu_custom_call.1} parent=1 // pred_region
      _
    $region49: #{tpu_custom_call.1} parent=1 // pred_fallthru
      _
    // Predicated region
    $region50: #{tpu_custom_call.1} parent=1 // pred_check
      _
    $region51: #{tpu_custom_call.1} parent=1 // pred_check_branch
      %61 = sbr.rel (0) target = $region53
    $region52: #{tpu_custom_call.1} parent=1 // pred_region
      %63 = vsyncadd [#allocation8], 0
      %s64 = sshll.u32 %s12, 4
      %s65 = int_to_ptr.hbm [resolvable:$true] %s64
      %s66 = sshll.u32 [#allocation7], 4
      %s67 = int_to_ptr.vmem [resolvable:$true] %s66
      %72 = dma.hbm_to_vmem [thread:$0]  %s65, 4096, %s67, [#allocation8], 64, 64, 4
    $region53: #{tpu_custom_call.1} parent=1 // pred_fallthru
      _
    // Predicated region
    $region54: #{tpu_custom_call.1} parent=1 // pred_check
      _
    $region55: #{tpu_custom_call.1} parent=1 // pred_check_branch
      %74 = sbr.rel (0) target = $region57
    $region56: #{tpu_custom_call.1} parent=1 // pred_region
      _
    $region57: #{tpu_custom_call.1} parent=1 // pred_fallthru
      _
    // Predicated region
    $region58: #{tpu_custom_call.1} parent=1 // pred_check
      _
    $region59: #{tpu_custom_call.1} parent=1 // pred_check_branch
      %76 = sbr.rel (0) target = $region61
    $region60: #{tpu_custom_call.1} parent=1 // pred_region
      %78 = dma.done [#allocation5], 4096
    $region61: #{tpu_custom_call.1} parent=1 // pred_fallthru
      _
    // Predicated region
    $region62: #{tpu_custom_call.1} parent=1 // pred_check
      _
    $region63: #{tpu_custom_call.1} parent=1 // pred_check_branch
      %80 = sbr.rel (0) target = $region65
    $region64: #{tpu_custom_call.1} parent=1 // pred_region
      %82 = dma.done [#allocation8], 4096
    $region65: #{tpu_custom_call.1} parent=1 // pred_fallthru
      _
    %v84 = vld [vmem:[%s0] sm:$0xff]
    %v85 = vld [vmem:[%s0 + $0x8] sm:$0xff]
    %v86 = vld [vmem:[%s1] sm:$0xff]
    %v87 = vld [vmem:[%s1 + $0x8] sm:$0xff]
    %v88 = vadd.f32 %v84, %v86
    %v89 = vadd.f32 %v85, %v87
    %90 = vadd.xlane.f32.xlu0 %v88
    %v91 = vpop.xlane.xlu0 %90
    %92 = vadd.xlane.f32.xlu0 %v89
    %v93 = vpop.xlane.xlu0 %92
    %v94 = vrcp.pop 128.0
    %v95 = vmul.f32 128.0, %v94
    %v96 = vsub.f32 1.0, %v95
    %v97 = vmul.f32 %v94, %v96
    %v98 = vadd.f32 %v94, %v97
    %vm99 = vweird.f32 %v94
    %v100 = vsel %vm99, %v94, %v98
    %v101 = vmul.f32 %v91, %v100
    %v102 = vmul.f32 %v93, %v100
    %v103 = vsub.f32 %v88, %v101
    %v104 = vsub.f32 %v89, %v102
    %v105 = vmul.f32 %v103, %v103
    %v106 = vmul.f32 %v104, %v104
    %107 = vadd.xlane.f32.xlu0 %v105
    %v108 = vpop.xlane.xlu0 %107
    %109 = vadd.xlane.f32.xlu0 %v106
    %v110 = vpop.xlane.xlu0 %109
    %v111 = vmul.f32 %v108, %v100
    %v112 = vmul.f32 %v110, %v100
    %v113 = vadd.f32 %v111, 1e-05
    %v114 = vadd.f32 %v112, 1e-05
    %v115 = vrsqrt.pop %v113
    %v116 = vmul.f32 %v115, %v113
    %v117 = vmul.f32 %v116, %v115
    %v118 = vmul.f32 0.5, %v117
    %v119 = vsub.f32 1.5, %v118
    %v120 = vmul.f32 %v115, %v119
    %vm121 = vweird.f32 %v113
    %vm122 = vweird.f32 %v115
    %vm123 = vmor %vm121, %vm122
    %v124 = vsel %vm123, %v115, %v120
    %v125 = vrsqrt.pop %v114
    %v126 = vmul.f32 %v125, %v114
    %v127 = vmul.f32 %v126, %v125
    %v128 = vmul.f32 0.5, %v127
    %v129 = vsub.f32 1.5, %v128
    %v130 = vmul.f32 %v125, %v129
    %vm131 = vweird.f32 %v114
    %vm132 = vweird.f32 %v125
    %vm133 = vmor %vm131, %vm132
    %v134 = vsel %vm133, %v125, %v130
    %v135 = vmul.f32 %v103, %v124
    %v136 = vmul.f32 %v104, %v134
    %v137 = vld [vmem:[%s2] sm:$0x1]
    %v139 = vperm.slane %v137, 0
    %v141 = vmul.f32 %v135, %v139
    %v142 = vmul.f32 %v136, %v139
    %v143 = vld [vmem:[%s3] sm:$0x1]
    %v145 = vperm.slane %v143, 0
    %v147 = vadd.f32 %v141, %v145
    %v148 = vadd.f32 %v142, %v145
    %v149 = vpack.c.bf16 %v148, %v147
    %v150 = vld [vmem:[%s6] sm:$0xff]
    %v151 = vld [vmem:[%s6 + $0x8] sm:$0xff]
    %v152 = vld [vmem:[%s6 + $0x10] sm:$0xff]
    %v153 = vld [vmem:[%s6 + $0x18] sm:$0xff]
    %v154 = vld [vmem:[%s6 + $0x20] sm:$0xff]
    %v155 = vld [vmem:[%s6 + $0x28] sm:$0xff]
    %v156 = vld [vmem:[%s6 + $0x30] sm:$0xff]
    %v157 = vld [vmem:[%s6 + $0x38] sm:$0xff]
    %v158 = vld [vmem:[%s6 + $0x40] sm:$0xff]
    %v159 = vld [vmem:[%s6 + $0x48] sm:$0xff]
    %v160 = vld [vmem:[%s6 + $0x50] sm:$0xff]
    %v161 = vld [vmem:[%s6 + $0x58] sm:$0xff]
    %v162 = vld [vmem:[%s6 + $0x60] sm:$0xff]
    %v163 = vld [vmem:[%s6 + $0x68] sm:$0xff]
    %v164 = vld [vmem:[%s6 + $0x70] sm:$0xff]
    %v165 = vld [vmem:[%s6 + $0x78] sm:$0xff]
    %v166 = vld [vmem:[%s7] sm:$0x3]
    %v168 = vperm.slane %v166, 0
    %v169 = vperm.slane %v166, 1
    %v188 = vunpack.c.l.b16 %v150
    %v189 = vunpack.c.h.b16 %v150
    %v190 = vunpack.c.l.b16 %v151
    %v191 = vunpack.c.h.b16 %v151
    %v192 = vunpack.c.l.b16 %v152
    %v193 = vunpack.c.h.b16 %v152
    %v194 = vunpack.c.l.b16 %v153
    %v195 = vunpack.c.h.b16 %v153
    %v196 = vunpack.c.l.b16 %v154
    %v197 = vunpack.c.h.b16 %v154
    %v198 = vunpack.c.l.b16 %v155
    %v199 = vunpack.c.h.b16 %v155
    %v200 = vunpack.c.l.b16 %v156
    %v201 = vunpack.c.h.b16 %v156
    %v202 = vunpack.c.l.b16 %v157
    %v203 = vunpack.c.h.b16 %v157
    %v204 = vunpack.c.l.b16 %v158
    %v205 = vunpack.c.h.b16 %v158
    %v206 = vunpack.c.l.b16 %v159
    %v207 = vunpack.c.h.b16 %v159
    %v208 = vunpack.c.l.b16 %v160
    %v209 = vunpack.c.h.b16 %v160
    %v210 = vunpack.c.l.b16 %v161
    %v211 = vunpack.c.h.b16 %v161
    %v212 = vunpack.c.l.b16 %v162
    %v213 = vunpack.c.h.b16 %v162
    %v214 = vunpack.c.l.b16 %v163
    %v215 = vunpack.c.h.b16 %v163
    %v216 = vunpack.c.l.b16 %v164
    %v217 = vunpack.c.h.b16 %v164
    %v218 = vunpack.c.l.b16 %v165
    %v219 = vunpack.c.h.b16 %v165
    %v220 = vpack.c.b16 %v190, %v188
    %v221 = vpack.c.b16 %v191, %v189
    %v222 = vpack.c.b16 %v194, %v192
    %v223 = vpack.c.b16 %v195, %v193
    %v224 = vpack.c.b16 %v198, %v196
    %v225 = vpack.c.b16 %v199, %v197
    %v226 = vpack.c.b16 %v202, %v200
    %v227 = vpack.c.b16 %v203, %v201
    %v228 = vpack.c.b16 %v206, %v204
    %v229 = vpack.c.b16 %v207, %v205
    %v230 = vpack.c.b16 %v210, %v208
    %v231 = vpack.c.b16 %v211, %v209
    %v232 = vpack.c.b16 %v214, %v212
    %v233 = vpack.c.b16 %v215, %v213
    %v234 = vpack.c.b16 %v218, %v216
    %v235 = vpack.c.b16 %v219, %v217
    %252 = vmatpush.bf16.msra.mxu0 %v234
    %253 = vmatpush.bf16.msra.mxu0 %v232
    %254 = vmatpush.bf16.msra.mxu0 %v230
    %255 = vmatpush.bf16.msra.mxu0 %v228
    %256 = vmatpush.bf16.msra.mxu0 %v226
    %257 = vmatpush.bf16.msra.mxu0 %v224
    %258 = vmatpush.bf16.msra.mxu0 %v222
    %259 = vmatpush.bf16.msra.mxu0 %v220
    %260 = vmatmul.bf16.gmra.mxu0 %v149
    %v261 = vpop.f32.mrf.mxu0
    %v262 = vadd.f32 %v168, %v261
    %v263 = vpop.f32.mrf.mxu0
    %v264 = vadd.f32 %v168, %v263
    %265 = vdwg.mxu0
    %266 = vmatpush.bf16.msra.mxu0 %v235
    %267 = vmatpush.bf16.msra.mxu0 %v233
    %268 = vmatpush.bf16.msra.mxu0 %v231
    %269 = vmatpush.bf16.msra.mxu0 %v229
    %270 = vmatpush.bf16.msra.mxu0 %v227
    %271 = vmatpush.bf16.msra.mxu0 %v225
    %272 = vmatpush.bf16.msra.mxu0 %v223
    %273 = vmatpush.bf16.msra.mxu0 %v221
    %274 = vmatmul.bf16.gmra.mxu0 %v149
    %v275 = vpop.f32.mrf.mxu0
    %v276 = vadd.f32 %v169, %v275
    %v277 = vpop.f32.mrf.mxu0
    %v278 = vadd.f32 %v169, %v277
    %279 = vdwg.mxu0
    %v280 = vpack.c.bf16 %v278, %v276
    %v281 = vpack.c.bf16 %v262, %v262
    %v282 = vpack.c.bf16 %v264, %v264
    %vm283 = vcmask 125952
    %284 = vst.msk [vmem:[#allocation2] sm:$0xf] %vm283, %v281
    %285 = vst.msk [vmem:[#allocation2 + $0x4] sm:$0xf] %vm283, %v282
    %288 = vrot.lane.b32.xlu0 %v281, 112
    %v289 = vpop.permute.xlu0 %288
    %290 = vrot.lane.b32.xlu0 %v282, 112
    %v291 = vpop.permute.xlu0 %290
    %294 = vst.msk [vmem:[#allocation2 + $0x8] sm:$0xf] %vm283, %v289
    %295 = vst.msk [vmem:[#allocation2 + $0xc] sm:$0xf] %vm283, %v291
    %296 = vrot.lane.b32.xlu0 %v281, 96
    %v297 = vpop.permute.xlu0 %296
    %298 = vrot.lane.b32.xlu0 %v282, 96
    %v299 = vpop.permute.xlu0 %298
    %302 = vst.msk [vmem:[#allocation2 + $0x10] sm:$0xf] %vm283, %v297
    %303 = vst.msk [vmem:[#allocation2 + $0x14] sm:$0xf] %vm283, %v299
    %304 = vrot.lane.b32.xlu0 %v281, 80
    %v305 = vpop.permute.xlu0 %304
    %306 = vrot.lane.b32.xlu0 %v282, 80
    %v307 = vpop.permute.xlu0 %306
    %310 = vst.msk [vmem:[#allocation2 + $0x18] sm:$0xf] %vm283, %v305
    %311 = vst.msk [vmem:[#allocation2 + $0x1c] sm:$0xf] %vm283, %v307
    %312 = vrot.lane.b32.xlu0 %v281, 64
    %v313 = vpop.permute.xlu0 %312
    %314 = vrot.lane.b32.xlu0 %v282, 64
    %v315 = vpop.permute.xlu0 %314
    %318 = vst.msk [vmem:[#allocation2 + $0x20] sm:$0xf] %vm283, %v313
    %319 = vst.msk [vmem:[#allocation2 + $0x24] sm:$0xf] %vm283, %v315
    %320 = vrot.lane.b32.xlu0 %v281, 48
    %v321 = vpop.permute.xlu0 %320
    %322 = vrot.lane.b32.xlu0 %v282, 48
    %v323 = vpop.permute.xlu0 %322
    %326 = vst.msk [vmem:[#allocation2 + $0x28] sm:$0xf] %vm283, %v321
    %327 = vst.msk [vmem:[#allocation2 + $0x2c] sm:$0xf] %vm283, %v323
    %328 = vrot.lane.b32.xlu0 %v281, 32
    %v329 = vpop.permute.xlu0 %328
    %330 = vrot.lane.b32.xlu0 %v282, 32
    %v331 = vpop.permute.xlu0 %330
    %334 = vst.msk [vmem:[#allocation2 + $0x30] sm:$0xf] %vm283, %v329
    %335 = vst.msk [vmem:[#allocation2 + $0x34] sm:$0xf] %vm283, %v331
    %336 = vrot.lane.b32.xlu0 %v281, 16
    %v337 = vpop.permute.xlu0 %336
    %338 = vrot.lane.b32.xlu0 %v282, 16
    %v339 = vpop.permute.xlu0 %338
    %342 = vst.msk [vmem:[#allocation2 + $0x38] sm:$0xf] %vm283, %v337
    %343 = vst.msk [vmem:[#allocation2 + $0x3c] sm:$0xf] %vm283, %v339
    %v344 = vld [vmem:[#allocation2] sm:$0xf]
    %v345 = vld [vmem:[#allocation2 + $0x4] sm:$0xf]
    %v346 = vld [vmem:[#allocation2 + $0x8] sm:$0xf]
    %v347 = vld [vmem:[#allocation2 + $0xc] sm:$0xf]
    %v348 = vld [vmem:[#allocation2 + $0x10] sm:$0xf]
    %v349 = vld [vmem:[#allocation2 + $0x14] sm:$0xf]
    %v350 = vld [vmem:[#allocation2 + $0x18] sm:$0xf]
    %v351 = vld [vmem:[#allocation2 + $0x1c] sm:$0xf]
    %v352 = vld [vmem:[#allocation2 + $0x20] sm:$0xf]
    %v353 = vld [vmem:[#allocation2 + $0x24] sm:$0xf]
    %v354 = vld [vmem:[#allocation2 + $0x28] sm:$0xf]
    %v355 = vld [vmem:[#allocation2 + $0x2c] sm:$0xf]
    %v356 = vld [vmem:[#allocation2 + $0x30] sm:$0xf]
    %v357 = vld [vmem:[#allocation2 + $0x34] sm:$0xf]
    %v358 = vld [vmem:[#allocation2 + $0x38] sm:$0xf]
    %v359 = vld [vmem:[#allocation2 + $0x3c] sm:$0xf]
    %v376 = vunpack.c.l.b16 %v344
    %v377 = vunpack.c.l.b16 %v345
    %v378 = vunpack.c.l.b16 %v346
    %v379 = vunpack.c.l.b16 %v347
    %v380 = vunpack.c.l.b16 %v348
    %v381 = vunpack.c.l.b16 %v349
    %v382 = vunpack.c.l.b16 %v350
    %v383 = vunpack.c.l.b16 %v351
    %v384 = vunpack.c.l.b16 %v352
    %v385 = vunpack.c.l.b16 %v353
    %v386 = vunpack.c.l.b16 %v354
    %v387 = vunpack.c.l.b16 %v355
    %v388 = vunpack.c.l.b16 %v356
    %v389 = vunpack.c.l.b16 %v357
    %v390 = vunpack.c.l.b16 %v358
    %v391 = vunpack.c.l.b16 %v359
    %v392 = vpack.c.b16 %v377, %v376
    %v393 = vpack.c.b16 %v379, %v378
    %v394 = vpack.c.b16 %v381, %v380
    %v395 = vpack.c.b16 %v383, %v382
    %v396 = vpack.c.b16 %v385, %v384
    %v397 = vpack.c.b16 %v387, %v386
    %v398 = vpack.c.b16 %v389, %v388
    %v399 = vpack.c.b16 %v391, %v390
    %vm400 = vcmask 130048
    %v402 = vsel %vm400, %v392, 0
    %v405 = vsel %vm400, %v393, 0
    %v408 = vsel %vm400, %v394, 0
    %v411 = vsel %vm400, %v395, 0
    %v414 = vsel %vm400, %v396, 0
    %v417 = vsel %vm400, %v397, 0
    %v420 = vsel %vm400, %v398, 0
    %v423 = vsel %vm400, %v399, 0
    %v426 = vsel %vm400, %v280, 0
    %428 = vmatpush.bf16.xpose.msra.mxu0 0
    %429 = vmatpush.bf16.xpose.msra.mxu0 0
    %430 = vmatpush.bf16.xpose.msra.mxu0 0
    %431 = vmatpush.bf16.xpose.msra.mxu0 0
    %432 = vmatpush.bf16.xpose.msra.mxu0 0
    %433 = vmatpush.bf16.xpose.msra.mxu0 0
    %434 = vmatpush.bf16.xpose.msra.mxu0 0
    %435 = vmatpush.bf16.xpose.msra.mxu0 %v426
    %436 = vmatmul.bf16.gmra.mxu0 %v402
    %v437 = vpop.f32.mrf.mxu0
    %v438 = vadd.f32 0.0, %v437
    %v439 = vpop.f32.mrf.mxu0
    %v440 = vadd.f32 0.0, %v439
    %441 = vmatmul.bf16.gmra.mxu0 %v405
    %v442 = vpop.f32.mrf.mxu0
    %v443 = vadd.f32 0.0, %v442
    %v444 = vpop.f32.mrf.mxu0
    %v445 = vadd.f32 0.0, %v444
    %446 = vmatmul.bf16.gmra.mxu0 %v408
    %v447 = vpop.f32.mrf.mxu0
    %v448 = vadd.f32 0.0, %v447
    %v449 = vpop.f32.mrf.mxu0
    %v450 = vadd.f32 0.0, %v449
    %451 = vmatmul.bf16.gmra.mxu0 %v411
    %v452 = vpop.f32.mrf.mxu0
    %v453 = vadd.f32 0.0, %v452
    %v454 = vpop.f32.mrf.mxu0
    %v455 = vadd.f32 0.0, %v454
    %456 = vmatmul.bf16.gmra.mxu0 %v414
    %v457 = vpop.f32.mrf.mxu0
    %v458 = vadd.f32 0.0, %v457
    %v459 = vpop.f32.mrf.mxu0
    %v460 = vadd.f32 0.0, %v459
    %461 = vmatmul.bf16.gmra.mxu0 %v417
    %v462 = vpop.f32.mrf.mxu0
    %v463 = vadd.f32 0.0, %v462
    %v464 = vpop.f32.mrf.mxu0
    %v465 = vadd.f32 0.0, %v464
    %466 = vmatmul.bf16.gmra.mxu0 %v420
    %v467 = vpop.f32.mrf.mxu0
    %v468 = vadd.f32 0.0, %v467
    %v469 = vpop.f32.mrf.mxu0
    %v470 = vadd.f32 0.0, %v469
    %471 = vmatmul.bf16.gmra.mxu0 %v423
    %v472 = vpop.f32.mrf.mxu0
    %v473 = vadd.f32 0.0, %v472
    %v474 = vpop.f32.mrf.mxu0
    %v475 = vadd.f32 0.0, %v474
    %476 = vdwg.mxu0
    %v477 = vlaneseq
    %v478 = vshrl.u32 %v477, 7
    %v479 = vadd.s32 %v478, 8
    %v480 = vadd.s32 %v478, 16
    %v481 = vadd.s32 %v478, 24
    %v482 = vadd.s32 %v478, 32
    %v483 = vadd.s32 %v478, 40
    %v484 = vadd.s32 %v478, 48
    %v485 = vadd.s32 %v478, 56
    %v486 = vadd.s32 %v478, 64
    %v487 = vadd.s32 %v478, 72
    %v488 = vadd.s32 %v478, 80
    %v489 = vadd.s32 %v478, 88
    %v490 = vadd.s32 %v478, 96
    %v491 = vadd.s32 %v478, 104
    %v492 = vadd.s32 %v478, 112
    %v493 = vadd.s32 %v478, 120
    %v494 = vlaneseq
    %v495 = vand.u32 %v494, 127
    %v496 = vand.u32 %v478, 15
    %v497 = vand.u32 %v479, 15
    %v498 = vand.u32 %v480, 15
    %v499 = vand.u32 %v481, 15
    %v500 = vand.u32 %v482, 15
    %v501 = vand.u32 %v483, 15
    %v502 = vand.u32 %v484, 15
    %v503 = vand.u32 %v485, 15
    %v504 = vand.u32 %v486, 15
    %v505 = vand.u32 %v487, 15
    %v506 = vand.u32 %v488, 15
    %v507 = vand.u32 %v489, 15
    %v508 = vand.u32 %v490, 15
    %v509 = vand.u32 %v491, 15
    %v510 = vand.u32 %v492, 15
    %v511 = vand.u32 %v493, 15
    %vm512 = vcmp.le.s32.totalorder %v495, %v496
    %vm513 = vcmp.le.s32.totalorder %v495, %v497
    %vm514 = vcmp.le.s32.totalorder %v495, %v498
    %vm515 = vcmp.le.s32.totalorder %v495, %v499
    %vm516 = vcmp.le.s32.totalorder %v495, %v500
    %vm517 = vcmp.le.s32.totalorder %v495, %v501
    %vm518 = vcmp.le.s32.totalorder %v495, %v502
    %vm519 = vcmp.le.s32.totalorder %v495, %v503
    %vm520 = vcmp.le.s32.totalorder %v495, %v504
    %vm521 = vcmp.le.s32.totalorder %v495, %v505
    %vm522 = vcmp.le.s32.totalorder %v495, %v506
    %vm523 = vcmp.le.s32.totalorder %v495, %v507
    %vm524 = vcmp.le.s32.totalorder %v495, %v508
    %vm525 = vcmp.le.s32.totalorder %v495, %v509
    %vm526 = vcmp.le.s32.totalorder %v495, %v510
    %vm527 = vcmp.le.s32.totalorder %v495, %v511
    %v528 = vsel %vm512, %v438, -1e+30
    %v529 = vsel %vm513, %v440, -1e+30
    %v530 = vsel %vm514, %v443, -1e+30
    %v531 = vsel %vm515, %v445, -1e+30
    %v532 = vsel %vm516, %v448, -1e+30
    %v533 = vsel %vm517, %v450, -1e+30
    %v534 = vsel %vm518, %v453, -1e+30
    %v535 = vsel %vm519, %v455, -1e+30
    %v536 = vsel %vm520, %v458, -1e+30
    %v537 = vsel %vm521, %v460, -1e+30
    %v538 = vsel %vm522, %v463, -1e+30
    %v539 = vsel %vm523, %v465, -1e+30
    %v540 = vsel %vm524, %v468, -1e+30
    %v541 = vsel %vm525, %v470, -1e+30
    %v542 = vsel %vm526, %v473, -1e+30
    %v543 = vsel %vm527, %v475, -1e+30
    %v544 = vsel %vm400, %v528, -inf
    %545 = vmax.xlane.f32.xlu0 %v544
    %v546 = vpop.xlane.xlu0 %545
    %v547 = vsel %vm400, %v529, -inf
    %548 = vmax.xlane.f32.xlu0 %v547
    %v549 = vpop.xlane.xlu0 %548
    %v550 = vsel %vm400, %v530, -inf
    %551 = vmax.xlane.f32.xlu0 %v550
    %v552 = vpop.xlane.xlu0 %551
    %v553 = vsel %vm400, %v531, -inf
    %554 = vmax.xlane.f32.xlu0 %v553
    %v555 = vpop.xlane.xlu0 %554
    %v556 = vsel %vm400, %v532, -inf
    %557 = vmax.xlane.f32.xlu0 %v556
    %v558 = vpop.xlane.xlu0 %557
    %v559 = vsel %vm400, %v533, -inf
    %560 = vmax.xlane.f32.xlu0 %v559
    %v561 = vpop.xlane.xlu0 %560
    %v562 = vsel %vm400, %v534, -inf
    %563 = vmax.xlane.f32.xlu0 %v562
    %v564 = vpop.xlane.xlu0 %563
    %v565 = vsel %vm400, %v535, -inf
    %566 = vmax.xlane.f32.xlu0 %v565
    %v567 = vpop.xlane.xlu0 %566
    %v568 = vsel %vm400, %v536, -inf
    %569 = vmax.xlane.f32.xlu0 %v568
    %v570 = vpop.xlane.xlu0 %569
    %v571 = vsel %vm400, %v537, -inf
    %572 = vmax.xlane.f32.xlu0 %v571
    %v573 = vpop.xlane.xlu0 %572
    %v574 = vsel %vm400, %v538, -inf
    %575 = vmax.xlane.f32.xlu0 %v574
    %v576 = vpop.xlane.xlu0 %575
    %v577 = vsel %vm400, %v539, -inf
    %578 = vmax.xlane.f32.xlu0 %v577
    %v579 = vpop.xlane.xlu0 %578
    %v580 = vsel %vm400, %v540, -inf
    %581 = vmax.xlane.f32.xlu0 %v580
    %v582 = vpop.xlane.xlu0 %581
    %v583 = vsel %vm400, %v541, -inf
    %584 = vmax.xlane.f32.xlu0 %v583
    %v585 = vpop.xlane.xlu0 %584
    %v586 = vsel %vm400, %v542, -inf
    %587 = vmax.xlane.f32.xlu0 %v586
    %v588 = vpop.xlane.xlu0 %587
    %v589 = vsel %vm400, %v543, -inf
    %590 = vmax.xlane.f32.xlu0 %v589
    %v591 = vpop.xlane.xlu0 %590
    %v592 = vsub.f32 %v528, %v546
    %v593 = vsub.f32 %v529, %v549
    %v594 = vsub.f32 %v530, %v552
    %v595 = vsub.f32 %v531, %v555
    %v596 = vsub.f32 %v532, %v558
    %v597 = vsub.f32 %v533, %v561
    %v598 = vsub.f32 %v534, %v564
    %v599 = vsub.f32 %v535, %v567
    %v600 = vsub.f32 %v536, %v570
    %v601 = vsub.f32 %v537, %v573
    %v602 = vsub.f32 %v538, %v576
    %v603 = vsub.f32 %v539, %v579
    %v604 = vsub.f32 %v540, %v582
    %v605 = vsub.f32 %v541, %v585
    %v606 = vsub.f32 %v542, %v588
    %v607 = vsub.f32 %v543, %v591
    %v608 = vmul.f32 %v592, 1.442695
    %v609 = vpow.pop %v608
    %v610 = vmul.f32 %v593, 1.442695
    %v611 = vpow.pop %v610
    %v612 = vmul.f32 %v594, 1.442695
    %v613 = vpow.pop %v612
    %v614 = vmul.f32 %v595, 1.442695
    %v615 = vpow.pop %v614
    %v616 = vmul.f32 %v596, 1.442695
    %v617 = vpow.pop %v616
    %v618 = vmul.f32 %v597, 1.442695
    %v619 = vpow.pop %v618
    %v620 = vmul.f32 %v598, 1.442695
    %v621 = vpow.pop %v620
    %v622 = vmul.f32 %v599, 1.442695
    %v623 = vpow.pop %v622
    %v624 = vmul.f32 %v600, 1.442695
    %v625 = vpow.pop %v624
    %v626 = vmul.f32 %v601, 1.442695
    %v627 = vpow.pop %v626
    %v628 = vmul.f32 %v602, 1.442695
    %v629 = vpow.pop %v628
    %v630 = vmul.f32 %v603, 1.442695
    %v631 = vpow.pop %v630
    %v632 = vmul.f32 %v604, 1.442695
    %v633 = vpow.pop %v632
    %v634 = vmul.f32 %v605, 1.442695
    %v635 = vpow.pop %v634
    %v636 = vmul.f32 %v606, 1.442695
    %v637 = vpow.pop %v636
    %v638 = vmul.f32 %v607, 1.442695
    %v639 = vpow.pop %v638
    %v640 = vsel %vm400, %v609, 0.0
    %641 = vadd.xlane.f32.xlu0 %v640
    %v642 = vpop.xlane.xlu0 %641
    %v643 = vsel %vm400, %v611, 0.0
    %644 = vadd.xlane.f32.xlu0 %v643
    %v645 = vpop.xlane.xlu0 %644
    %v646 = vsel %vm400, %v613, 0.0
    %647 = vadd.xlane.f32.xlu0 %v646
    %v648 = vpop.xlane.xlu0 %647
    %v649 = vsel %vm400, %v615, 0.0
    %650 = vadd.xlane.f32.xlu0 %v649
    %v651 = vpop.xlane.xlu0 %650
    %v652 = vsel %vm400, %v617, 0.0
    %653 = vadd.xlane.f32.xlu0 %v652
    %v654 = vpop.xlane.xlu0 %653
    %v655 = vsel %vm400, %v619, 0.0
    %656 = vadd.xlane.f32.xlu0 %v655
    %v657 = vpop.xlane.xlu0 %656
    %v658 = vsel %vm400, %v621, 0.0
    %659 = vadd.xlane.f32.xlu0 %v658
    %v660 = vpop.xlane.xlu0 %659
    %v661 = vsel %vm400, %v623, 0.0
    %662 = vadd.xlane.f32.xlu0 %v661
    %v663 = vpop.xlane.xlu0 %662
    %v664 = vsel %vm400, %v625, 0.0
    %665 = vadd.xlane.f32.xlu0 %v664
    %v666 = vpop.xlane.xlu0 %665
    %v667 = vsel %vm400, %v627, 0.0
    %668 = vadd.xlane.f32.xlu0 %v667
    %v669 = vpop.xlane.xlu0 %668
    %v670 = vsel %vm400, %v629, 0.0
    %671 = vadd.xlane.f32.xlu0 %v670
    %v672 = vpop.xlane.xlu0 %671
    %v673 = vsel %vm400, %v631, 0.0
    %674 = vadd.xlane.f32.xlu0 %v673
    %v675 = vpop.xlane.xlu0 %674
    %v676 = vsel %vm400, %v633, 0.0
    %677 = vadd.xlane.f32.xlu0 %v676
    %v678 = vpop.xlane.xlu0 %677
    %v679 = vsel %vm400, %v635, 0.0
    %680 = vadd.xlane.f32.xlu0 %v679
    %v681 = vpop.xlane.xlu0 %680
    %v682 = vsel %vm400, %v637, 0.0
    %683 = vadd.xlane.f32.xlu0 %v682
    %v684 = vpop.xlane.xlu0 %683
    %v685 = vsel %vm400, %v639, 0.0
    %686 = vadd.xlane.f32.xlu0 %v685
    %v687 = vpop.xlane.xlu0 %686
    %v688 = vpack.c.bf16 %v611, %v609
    %v689 = vpack.c.bf16 %v615, %v613
    %v690 = vpack.c.bf16 %v619, %v617
    %v691 = vpack.c.bf16 %v623, %v621
    %v692 = vpack.c.bf16 %v627, %v625
    %v693 = vpack.c.bf16 %v631, %v629
    %v694 = vpack.c.bf16 %v635, %v633
    %v695 = vpack.c.bf16 %v639, %v637
    %697 = vrot.lane.b32.xlu0 %v280, 112
    %v698 = vpop.permute.xlu0 %697
    %v701 = vsel %vm400, %v688, 0
    %v704 = vsel %vm400, %v689, 0
    %v707 = vsel %vm400, %v690, 0
    %v710 = vsel %vm400, %v691, 0
    %v713 = vsel %vm400, %v692, 0
    %v716 = vsel %vm400, %v693, 0
    %v719 = vsel %vm400, %v694, 0
    %v722 = vsel %vm400, %v695, 0
    %724 = vmatpush.bf16.msra.mxu0 0
    %725 = vmatpush.bf16.msra.mxu0 0
    %726 = vmatpush.bf16.msra.mxu0 0
    %727 = vmatpush.bf16.msra.mxu0 0
    %728 = vmatpush.bf16.msra.mxu0 0
    %729 = vmatpush.bf16.msra.mxu0 0
    %730 = vmatpush.bf16.msra.mxu0 0
    %731 = vmatpush.bf16.msra.mxu0 %v698
    %732 = vmatmul.bf16.gmra.mxu0 %v701
    %v733 = vpop.f32.mrf.mxu0
    %v734 = vadd.f32 0.0, %v733
    %v735 = vpop.f32.mrf.mxu0
    %v736 = vadd.f32 0.0, %v735
    %737 = vmatmul.bf16.gmra.mxu0 %v704
    %v738 = vpop.f32.mrf.mxu0
    %v739 = vadd.f32 0.0, %v738
    %v740 = vpop.f32.mrf.mxu0
    %v741 = vadd.f32 0.0, %v740
    %742 = vmatmul.bf16.gmra.mxu0 %v707
    %v743 = vpop.f32.mrf.mxu0
    %v744 = vadd.f32 0.0, %v743
    %v745 = vpop.f32.mrf.mxu0
    %v746 = vadd.f32 0.0, %v745
    %747 = vmatmul.bf16.gmra.mxu0 %v710
    %v748 = vpop.f32.mrf.mxu0
    %v749 = vadd.f32 0.0, %v748
    %v750 = vpop.f32.mrf.mxu0
    %v751 = vadd.f32 0.0, %v750
    %752 = vmatmul.bf16.gmra.mxu0 %v713
    %v753 = vpop.f32.mrf.mxu0
    %v754 = vadd.f32 0.0, %v753
    %v755 = vpop.f32.mrf.mxu0
    %v756 = vadd.f32 0.0, %v755
    %757 = vmatmul.bf16.gmra.mxu0 %v716
    %v758 = vpop.f32.mrf.mxu0
    %v759 = vadd.f32 0.0, %v758
    %v760 = vpop.f32.mrf.mxu0
    %v761 = vadd.f32 0.0, %v760
    %762 = vmatmul.bf16.gmra.mxu0 %v719
    %v763 = vpop.f32.mrf.mxu0
    %v764 = vadd.f32 0.0, %v763
    %v765 = vpop.f32.mrf.mxu0
    %v766 = vadd.f32 0.0, %v765
    %767 = vmatmul.bf16.gmra.mxu0 %v722
    %v768 = vpop.f32.mrf.mxu0
    %v769 = vadd.f32 0.0, %v768
    %v770 = vpop.f32.mrf.mxu0
    %v771 = vadd.f32 0.0, %v770
    %772 = vdwg.mxu0
    %v773 = vrcp.pop %v642
    %v774 = vmul.f32 %v642, %v773
    %v775 = vsub.f32 1.0, %v774
    %v776 = vmul.f32 %v773, %v775
    %v777 = vadd.f32 %v773, %v776
    %vm778 = vweird.f32 %v642
    %vm779 = vweird.f32 %v773
    %vm780 = vmor %vm778, %vm779
    %v781 = vsel %vm780, %v773, %v777
    %v782 = vand.u32 2147483647, %v642
    %vm783 = vcmp.eq.f32.partialorder %v782, 8.507059e+37
    %v784 = vand.u32 %v642, 2147483648
    %v785 = vor.u32 1.1754944e-38, %v784
    %v786 = vsel %vm783, %v785, %v781
    %v787 = vrcp.pop %v645
    %v788 = vmul.f32 %v645, %v787
    %v789 = vsub.f32 1.0, %v788
    %v790 = vmul.f32 %v787, %v789
    %v791 = vadd.f32 %v787, %v790
    %vm792 = vweird.f32 %v645
    %vm793 = vweird.f32 %v787
    %vm794 = vmor %vm792, %vm793
    %v795 = vsel %vm794, %v787, %v791
    %v796 = vand.u32 2147483647, %v645
    %vm797 = vcmp.eq.f32.partialorder %v796, 8.507059e+37
    %v798 = vand.u32 %v645, 2147483648
    %v799 = vor.u32 1.1754944e-38, %v798
    %v800 = vsel %vm797, %v799, %v795
    %v801 = vrcp.pop %v648
    %v802 = vmul.f32 %v648, %v801
    %v803 = vsub.f32 1.0, %v802
    %v804 = vmul.f32 %v801, %v803
    %v805 = vadd.f32 %v801, %v804
    %vm806 = vweird.f32 %v648
    %vm807 = vweird.f32 %v801
    %vm808 = vmor %vm806, %vm807
    %v809 = vsel %vm808, %v801, %v805
    %v810 = vand.u32 2147483647, %v648
    %vm811 = vcmp.eq.f32.partialorder %v810, 8.507059e+37
    %v812 = vand.u32 %v648, 2147483648
    %v813 = vor.u32 1.1754944e-38, %v812
    %v814 = vsel %vm811, %v813, %v809
    %v815 = vrcp.pop %v651
    %v816 = vmul.f32 %v651, %v815
    %v817 = vsub.f32 1.0, %v816
    %v818 = vmul.f32 %v815, %v817
    %v819 = vadd.f32 %v815, %v818
    %vm820 = vweird.f32 %v651
    %vm821 = vweird.f32 %v815
    %vm822 = vmor %vm820, %vm821
    %v823 = vsel %vm822, %v815, %v819
    %v824 = vand.u32 2147483647, %v651
    %vm825 = vcmp.eq.f32.partialorder %v824, 8.507059e+37
    %v826 = vand.u32 %v651, 2147483648
    %v827 = vor.u32 1.1754944e-38, %v826
    %v828 = vsel %vm825, %v827, %v823
    %v829 = vrcp.pop %v654
    %v830 = vmul.f32 %v654, %v829
    %v831 = vsub.f32 1.0, %v830
    %v832 = vmul.f32 %v829, %v831
    %v833 = vadd.f32 %v829, %v832
    %vm834 = vweird.f32 %v654
    %vm835 = vweird.f32 %v829
    %vm836 = vmor %vm834, %vm835
    %v837 = vsel %vm836, %v829, %v833
    %v838 = vand.u32 2147483647, %v654
    %vm839 = vcmp.eq.f32.partialorder %v838, 8.507059e+37
    %v840 = vand.u32 %v654, 2147483648
    %v841 = vor.u32 1.1754944e-38, %v840
    %v842 = vsel %vm839, %v841, %v837
    %v843 = vrcp.pop %v657
    %v844 = vmul.f32 %v657, %v843
    %v845 = vsub.f32 1.0, %v844
    %v846 = vmul.f32 %v843, %v845
    %v847 = vadd.f32 %v843, %v846
    %vm848 = vweird.f32 %v657
    %vm849 = vweird.f32 %v843
    %vm850 = vmor %vm848, %vm849
    %v851 = vsel %vm850, %v843, %v847
    %v852 = vand.u32 2147483647, %v657
    %vm853 = vcmp.eq.f32.partialorder %v852, 8.507059e+37
    %v854 = vand.u32 %v657, 2147483648
    %v855 = vor.u32 1.1754944e-38, %v854
    %v856 = vsel %vm853, %v855, %v851
    %v857 = vrcp.pop %v660
    %v858 = vmul.f32 %v660, %v857
    %v859 = vsub.f32 1.0, %v858
    %v860 = vmul.f32 %v857, %v859
    %v861 = vadd.f32 %v857, %v860
    %vm862 = vweird.f32 %v660
    %vm863 = vweird.f32 %v857
    %vm864 = vmor %vm862, %vm863
    %v865 = vsel %vm864, %v857, %v861
    %v866 = vand.u32 2147483647, %v660
    %vm867 = vcmp.eq.f32.partialorder %v866, 8.507059e+37
    %v868 = vand.u32 %v660, 2147483648
    %v869 = vor.u32 1.1754944e-38, %v868
    %v870 = vsel %vm867, %v869, %v865
    %v871 = vrcp.pop %v663
    %v872 = vmul.f32 %v663, %v871
    %v873 = vsub.f32 1.0, %v872
    %v874 = vmul.f32 %v871, %v873
    %v875 = vadd.f32 %v871, %v874
    %vm876 = vweird.f32 %v663
    %vm877 = vweird.f32 %v871
    %vm878 = vmor %vm876, %vm877
    %v879 = vsel %vm878, %v871, %v875
    %v880 = vand.u32 2147483647, %v663
    %vm881 = vcmp.eq.f32.partialorder %v880, 8.507059e+37
    %v882 = vand.u32 %v663, 2147483648
    %v883 = vor.u32 1.1754944e-38, %v882
    %v884 = vsel %vm881, %v883, %v879
    %v885 = vrcp.pop %v666
    %v886 = vmul.f32 %v666, %v885
    %v887 = vsub.f32 1.0, %v886
    %v888 = vmul.f32 %v885, %v887
    %v889 = vadd.f32 %v885, %v888
    %vm890 = vweird.f32 %v666
    %vm891 = vweird.f32 %v885
    %vm892 = vmor %vm890, %vm891
    %v893 = vsel %vm892, %v885, %v889
    %v894 = vand.u32 2147483647, %v666
    %vm895 = vcmp.eq.f32.partialorder %v894, 8.507059e+37
    %v896 = vand.u32 %v666, 2147483648
    %v897 = vor.u32 1.1754944e-38, %v896
    %v898 = vsel %vm895, %v897, %v893
    %v899 = vrcp.pop %v669
    %v900 = vmul.f32 %v669, %v899
    %v901 = vsub.f32 1.0, %v900
    %v902 = vmul.f32 %v899, %v901
    %v903 = vadd.f32 %v899, %v902
    %vm904 = vweird.f32 %v669
    %vm905 = vweird.f32 %v899
    %vm906 = vmor %vm904, %vm905
    %v907 = vsel %vm906, %v899, %v903
    %v908 = vand.u32 2147483647, %v669
    %vm909 = vcmp.eq.f32.partialorder %v908, 8.507059e+37
    %v910 = vand.u32 %v669, 2147483648
    %v911 = vor.u32 1.1754944e-38, %v910
    %v912 = vsel %vm909, %v911, %v907
    %v913 = vrcp.pop %v672
    %v914 = vmul.f32 %v672, %v913
    %v915 = vsub.f32 1.0, %v914
    %v916 = vmul.f32 %v913, %v915
    %v917 = vadd.f32 %v913, %v916
    %vm918 = vweird.f32 %v672
    %vm919 = vweird.f32 %v913
    %vm920 = vmor %vm918, %vm919
    %v921 = vsel %vm920, %v913, %v917
    %v922 = vand.u32 2147483647, %v672
    %vm923 = vcmp.eq.f32.partialorder %v922, 8.507059e+37
    %v924 = vand.u32 %v672, 2147483648
    %v925 = vor.u32 1.1754944e-38, %v924
    %v926 = vsel %vm923, %v925, %v921
    %v927 = vrcp.pop %v675
    %v928 = vmul.f32 %v675, %v927
    %v929 = vsub.f32 1.0, %v928
    %v930 = vmul.f32 %v927, %v929
    %v931 = vadd.f32 %v927, %v930
    %vm932 = vweird.f32 %v675
    %vm933 = vweird.f32 %v927
    %vm934 = vmor %vm932, %vm933
    %v935 = vsel %vm934, %v927, %v931
    %v936 = vand.u32 2147483647, %v675
    %vm937 = vcmp.eq.f32.partialorder %v936, 8.507059e+37
    %v938 = vand.u32 %v675, 2147483648
    %v939 = vor.u32 1.1754944e-38, %v938
    %v940 = vsel %vm937, %v939, %v935
    %v941 = vrcp.pop %v678
    %v942 = vmul.f32 %v678, %v941
    %v943 = vsub.f32 1.0, %v942
    %v944 = vmul.f32 %v941, %v943
    %v945 = vadd.f32 %v941, %v944
    %vm946 = vweird.f32 %v678
    %vm947 = vweird.f32 %v941
    %vm948 = vmor %vm946, %vm947
    %v949 = vsel %vm948, %v941, %v945
    %v950 = vand.u32 2147483647, %v678
    %vm951 = vcmp.eq.f32.partialorder %v950, 8.507059e+37
    %v952 = vand.u32 %v678, 2147483648
    %v953 = vor.u32 1.1754944e-38, %v952
    %v954 = vsel %vm951, %v953, %v949
    %v955 = vrcp.pop %v681
    %v956 = vmul.f32 %v681, %v955
    %v957 = vsub.f32 1.0, %v956
    %v958 = vmul.f32 %v955, %v957
    %v959 = vadd.f32 %v955, %v958
    %vm960 = vweird.f32 %v681
    %vm961 = vweird.f32 %v955
    %vm962 = vmor %vm960, %vm961
    %v963 = vsel %vm962, %v955, %v959
    %v964 = vand.u32 2147483647, %v681
    %vm965 = vcmp.eq.f32.partialorder %v964, 8.507059e+37
    %v966 = vand.u32 %v681, 2147483648
    %v967 = vor.u32 1.1754944e-38, %v966
    %v968 = vsel %vm965, %v967, %v963
    %v969 = vrcp.pop %v684
    %v970 = vmul.f32 %v684, %v969
    %v971 = vsub.f32 1.0, %v970
    %v972 = vmul.f32 %v969, %v971
    %v973 = vadd.f32 %v969, %v972
    %vm974 = vweird.f32 %v684
    %vm975 = vweird.f32 %v969
    %vm976 = vmor %vm974, %vm975
    %v977 = vsel %vm976, %v969, %v973
    %v978 = vand.u32 2147483647, %v684
    %vm979 = vcmp.eq.f32.partialorder %v978, 8.507059e+37
    %v980 = vand.u32 %v684, 2147483648
    %v981 = vor.u32 1.1754944e-38, %v980
    %v982 = vsel %vm979, %v981, %v977
    %v983 = vrcp.pop %v687
    %v984 = vmul.f32 %v687, %v983
    %v985 = vsub.f32 1.0, %v984
    %v986 = vmul.f32 %v983, %v985
    %v987 = vadd.f32 %v983, %v986
    %vm988 = vweird.f32 %v687
    %vm989 = vweird.f32 %v983
    %vm990 = vmor %vm988, %vm989
    %v991 = vsel %vm990, %v983, %v987
    %v992 = vand.u32 2147483647, %v687
    %vm993 = vcmp.eq.f32.partialorder %v992, 8.507059e+37
    %v994 = vand.u32 %v687, 2147483648
    %v995 = vor.u32 1.1754944e-38, %v994
    %v996 = vsel %vm993, %v995, %v991
    %v997 = vmul.f32 %v734, %v786
    %v998 = vmul.f32 %v736, %v800
    %v999 = vmul.f32 %v739, %v814
    %v1000 = vmul.f32 %v741, %v828
    %v1001 = vmul.f32 %v744, %v842
    %v1002 = vmul.f32 %v746, %v856
    %v1003 = vmul.f32 %v749, %v870
    %v1004 = vmul.f32 %v751, %v884
    %v1005 = vmul.f32 %v754, %v898
    %v1006 = vmul.f32 %v756, %v912
    %v1007 = vmul.f32 %v759, %v926
    %v1008 = vmul.f32 %v761, %v940
    %v1009 = vmul.f32 %v764, %v954
    %v1010 = vmul.f32 %v766, %v968
    %v1011 = vmul.f32 %v769, %v982
    %v1012 = vmul.f32 %v771, %v996
    %v1013 = vpack.c.bf16 %v997, %v997
    %v1014 = vpack.c.bf16 %v998, %v998
    %1015 = vst.msk [vmem:[#allocation3] sm:$0xf] %vm283, %v1013
    %1016 = vst.msk [vmem:[#allocation3 + $0x4] sm:$0xf] %vm283, %v1014
    %v1017 = vpack.c.bf16 %v999, %v999
    %v1018 = vpack.c.bf16 %v1000, %v1000
    %1021 = vrot.lane.b32.xlu0 %v1017, 16
    %v1022 = vpop.permute.xlu0 %1021
    %1023 = vrot.lane.b32.xlu0 %v1018, 16
    %v1024 = vpop.permute.xlu0 %1023
    %vm1027 = vcmask 257152
    %1028 = vst.msk [vmem:[#allocation3] sm:$0xf] %vm1027, %v1022
    %1029 = vst.msk [vmem:[#allocation3 + $0x4] sm:$0xf] %vm1027, %v1024
    %v1030 = vpack.c.bf16 %v1001, %v1001
    %v1031 = vpack.c.bf16 %v1002, %v1002
    %1034 = vrot.lane.b32.xlu0 %v1030, 32
    %v1035 = vpop.permute.xlu0 %1034
    %1036 = vrot.lane.b32.xlu0 %v1031, 32
    %v1037 = vpop.permute.xlu0 %1036
    %vm1040 = vcmask 388352
    %1041 = vst.msk [vmem:[#allocation3] sm:$0xf] %vm1040, %v1035
    %1042 = vst.msk [vmem:[#allocation3 + $0x4] sm:$0xf] %vm1040, %v1037
    %v1043 = vpack.c.bf16 %v1003, %v1003
    %v1044 = vpack.c.bf16 %v1004, %v1004
    %1047 = vrot.lane.b32.xlu0 %v1043, 48
    %v1048 = vpop.permute.xlu0 %1047
    %1049 = vrot.lane.b32.xlu0 %v1044, 48
    %v1050 = vpop.permute.xlu0 %1049
    %vm1053 = vcmask 519552
    %1054 = vst.msk [vmem:[#allocation3] sm:$0xf] %vm1053, %v1048
    %1055 = vst.msk [vmem:[#allocation3 + $0x4] sm:$0xf] %vm1053, %v1050
    %v1056 = vpack.c.bf16 %v1005, %v1005
    %v1057 = vpack.c.bf16 %v1006, %v1006
    %1060 = vrot.lane.b32.xlu0 %v1056, 64
    %v1061 = vpop.permute.xlu0 %1060
    %1062 = vrot.lane.b32.xlu0 %v1057, 64
    %v1063 = vpop.permute.xlu0 %1062
    %vm1066 = vcmask 650752
    %1067 = vst.msk [vmem:[#allocation3] sm:$0xf] %vm1066, %v1061
    %1068 = vst.msk [vmem:[#allocation3 + $0x4] sm:$0xf] %vm1066, %v1063
    %v1069 = vpack.c.bf16 %v1007, %v1007
    %v1070 = vpack.c.bf16 %v1008, %v1008
    %1073 = vrot.lane.b32.xlu0 %v1069, 80
    %v1074 = vpop.permute.xlu0 %1073
    %1075 = vrot.lane.b32.xlu0 %v1070, 80
    %v1076 = vpop.permute.xlu0 %1075
    %vm1079 = vcmask 781952
    %1080 = vst.msk [vmem:[#allocation3] sm:$0xf] %vm1079, %v1074
    %1081 = vst.msk [vmem:[#allocation3 + $0x4] sm:$0xf] %vm1079, %v1076
    %v1082 = vpack.c.bf16 %v1009, %v1009
    %v1083 = vpack.c.bf16 %v1010, %v1010
    %1086 = vrot.lane.b32.xlu0 %v1082, 96
    %v1087 = vpop.permute.xlu0 %1086
    %1088 = vrot.lane.b32.xlu0 %v1083, 96
    %v1089 = vpop.permute.xlu0 %1088
    %vm1092 = vcmask 913152
    %1093 = vst.msk [vmem:[#allocation3] sm:$0xf] %vm1092, %v1087
    %1094 = vst.msk [vmem:[#allocation3 + $0x4] sm:$0xf] %vm1092, %v1089
    %v1095 = vpack.c.bf16 %v1011, %v1011
    %v1096 = vpack.c.bf16 %v1012, %v1012
    %1099 = vrot.lane.b32.xlu0 %v1095, 112
    %v1100 = vpop.permute.xlu0 %1099
    %1101 = vrot.lane.b32.xlu0 %v1096, 112
    %v1102 = vpop.permute.xlu0 %1101
    %vm1105 = vcmask 1044352
    %1106 = vst.msk [vmem:[#allocation3] sm:$0xf] %vm1105, %v1100
    %1107 = vst.msk [vmem:[#allocation3 + $0x4] sm:$0xf] %vm1105, %v1102
    %v1108 = vld [vmem:[#allocation3] sm:$0xf]
    %v1109 = vld [vmem:[#allocation3 + $0x4] sm:$0xf]
    %v1110 = vld [vmem:[%s8] sm:$0xf]
    %v1111 = vld [vmem:[%s8 + $0x4] sm:$0xf]
    %v1112 = vld [vmem:[%s8 + $0x8] sm:$0xf]
    %v1113 = vld [vmem:[%s8 + $0xc] sm:$0xf]
    %v1114 = vld [vmem:[%s8 + $0x10] sm:$0xf]
    %v1115 = vld [vmem:[%s8 + $0x14] sm:$0xf]
    %v1116 = vld [vmem:[%s8 + $0x18] sm:$0xf]
    %v1117 = vld [vmem:[%s8 + $0x1c] sm:$0xf]
    %v1118 = vld [vmem:[%s8 + $0x20] sm:$0xf]
    %v1119 = vld [vmem:[%s8 + $0x24] sm:$0xf]
    %v1120 = vld [vmem:[%s8 + $0x28] sm:$0xf]
    %v1121 = vld [vmem:[%s8 + $0x2c] sm:$0xf]
    %v1122 = vld [vmem:[%s8 + $0x30] sm:$0xf]
    %v1123 = vld [vmem:[%s8 + $0x34] sm:$0xf]
    %v1124 = vld [vmem:[%s8 + $0x38] sm:$0xf]
    %v1125 = vld [vmem:[%s8 + $0x3c] sm:$0xf]
    %v1126 = vld [vmem:[%s9] sm:$0x1]
    %v1128 = vperm.slane %v1126, 0
    %v1132 = vunpack.c.l.b16 %v1108
    %v1133 = vunpack.c.l.b16 %v1109
    %v1134 = vpack.c.b16 %v1133, %v1132
    %v1152 = vunpack.c.l.b16 %v1110
    %v1153 = vunpack.c.l.b16 %v1111
    %v1154 = vunpack.c.l.b16 %v1112
    %v1155 = vunpack.c.l.b16 %v1113
    %v1156 = vunpack.c.l.b16 %v1114
    %v1157 = vunpack.c.l.b16 %v1115
    %v1158 = vunpack.c.l.b16 %v1116
    %v1159 = vunpack.c.l.b16 %v1117
    %v1160 = vunpack.c.l.b16 %v1118
    %v1161 = vunpack.c.l.b16 %v1119
    %v1162 = vunpack.c.l.b16 %v1120
    %v1163 = vunpack.c.l.b16 %v1121
    %v1164 = vunpack.c.l.b16 %v1122
    %v1165 = vunpack.c.l.b16 %v1123
    %v1166 = vunpack.c.l.b16 %v1124
    %v1167 = vunpack.c.l.b16 %v1125
    %v1168 = vpack.c.b16 %v1153, %v1152
    %v1169 = vpack.c.b16 %v1155, %v1154
    %v1170 = vpack.c.b16 %v1157, %v1156
    %v1171 = vpack.c.b16 %v1159, %v1158
    %v1172 = vpack.c.b16 %v1161, %v1160
    %v1173 = vpack.c.b16 %v1163, %v1162
    %v1174 = vpack.c.b16 %v1165, %v1164
    %v1175 = vpack.c.b16 %v1167, %v1166
    %1184 = vmatpush.bf16.msra.mxu0 %v1175
    %1185 = vmatpush.bf16.msra.mxu0 %v1174
    %1186 = vmatpush.bf16.msra.mxu0 %v1173
    %1187 = vmatpush.bf16.msra.mxu0 %v1172
    %1188 = vmatpush.bf16.msra.mxu0 %v1171
    %1189 = vmatpush.bf16.msra.mxu0 %v1170
    %1190 = vmatpush.bf16.msra.mxu0 %v1169
    %1191 = vmatpush.bf16.msra.mxu0 %v1168
    %1192 = vmatmul.bf16.gmra.mxu0 %v1134
    %v1193 = vpop.f32.mrf.mxu0
    %v1194 = vadd.f32 %v1128, %v1193
    %v1195 = vpop.f32.mrf.mxu0
    %v1196 = vadd.f32 %v1128, %v1195
    %1197 = vdwg.mxu0
    %v1198 = vadd.f32 %v1194, %v88
    %v1199 = vadd.f32 %v1196, %v89
    %1200 = vst [vmem:[#allocation10] sm:$0xff] %v1198
    %1201 = vst [vmem:[#allocation10 + $0x8] sm:$0xff] %v1199
    %1202 = vadd.xlane.f32.xlu0 %v1198
    %v1203 = vpop.xlane.xlu0 %1202
    %1204 = vadd.xlane.f32.xlu0 %v1199
    %v1205 = vpop.xlane.xlu0 %1204
    %v1206 = vmul.f32 %v1203, %v100
    %v1207 = vmul.f32 %v1205, %v100
    %v1208 = vsub.f32 %v1198, %v1206
    %v1209 = vsub.f32 %v1199, %v1207
    %v1210 = vmul.f32 %v1208, %v1208
    %v1211 = vmul.f32 %v1209, %v1209
    %1212 = vadd.xlane.f32.xlu0 %v1210
    %v1213 = vpop.xlane.xlu0 %1212
    %1214 = vadd.xlane.f32.xlu0 %v1211
    %v1215 = vpop.xlane.xlu0 %1214
    %v1216 = vmul.f32 %v1213, %v100
    %v1217 = vmul.f32 %v1215, %v100
    %v1218 = vadd.f32 %v1216, 1e-05
    %v1219 = vadd.f32 %v1217, 1e-05
    %v1220 = vrsqrt.pop %v1218
    %v1221 = vmul.f32 %v1220, %v1218
    %v1222 = vmul.f32 %v1221, %v1220
    %v1223 = vmul.f32 0.5, %v1222
    %v1224 = vsub.f32 1.5, %v1223
    %v1225 = vmul.f32 %v1220, %v1224
    %vm1226 = vweird.f32 %v1218
    %vm1227 = vweird.f32 %v1220
    %vm1228 = vmor %vm1226, %vm1227
    %v1229 = vsel %vm1228, %v1220, %v1225
    %v1230 = vrsqrt.pop %v1219
    %v1231 = vmul.f32 %v1230, %v1219
    %v1232 = vmul.f32 %v1231, %v1230
    %v1233 = vmul.f32 0.5, %v1232
    %v1234 = vsub.f32 1.5, %v1233
    %v1235 = vmul.f32 %v1230, %v1234
    %vm1236 = vweird.f32 %v1219
    %vm1237 = vweird.f32 %v1230
    %vm1238 = vmor %vm1236, %vm1237
    %v1239 = vsel %vm1238, %v1230, %v1235
    %v1240 = vmul.f32 %v1208, %v1229
    %v1241 = vmul.f32 %v1209, %v1239
    %v1242 = vld [vmem:[%s4] sm:$0x1]
    %v1244 = vperm.slane %v1242, 0
    %v1246 = vmul.f32 %v1240, %v1244
    %v1247 = vmul.f32 %v1241, %v1244
    %v1248 = vld [vmem:[%s5] sm:$0x1]
    %v1250 = vperm.slane %v1248, 0
    %v1252 = vadd.f32 %v1246, %v1250
    %v1253 = vadd.f32 %v1247, %v1250
    %v1254 = vpack.c.bf16 %v1253, %v1252
    %v1255 = vld [vmem:[#allocation4] sm:$0xff]
    %v1256 = vld [vmem:[#allocation4 + $0x8] sm:$0xff]
    %v1257 = vld [vmem:[#allocation4 + $0x10] sm:$0xff]
    %v1258 = vld [vmem:[#allocation4 + $0x18] sm:$0xff]
    %v1259 = vld [vmem:[#allocation4 + $0x20] sm:$0xff]
    %v1260 = vld [vmem:[#allocation4 + $0x28] sm:$0xff]
    %v1261 = vld [vmem:[#allocation4 + $0x30] sm:$0xff]
    %v1262 = vld [vmem:[#allocation4 + $0x38] sm:$0xff]
    %v1263 = vld [vmem:[#allocation4 + $0x40] sm:$0xff]
    %v1264 = vld [vmem:[#allocation4 + $0x48] sm:$0xff]
    %v1265 = vld [vmem:[#allocation4 + $0x50] sm:$0xff]
    %v1266 = vld [vmem:[#allocation4 + $0x58] sm:$0xff]
    %v1267 = vld [vmem:[#allocation4 + $0x60] sm:$0xff]
    %v1268 = vld [vmem:[#allocation4 + $0x68] sm:$0xff]
    %v1269 = vld [vmem:[#allocation4 + $0x70] sm:$0xff]
    %v1270 = vld [vmem:[#allocation4 + $0x78] sm:$0xff]
    %v1271 = vld [vmem:[#allocation4 + $0x80] sm:$0xff]
    %v1272 = vld [vmem:[#allocation4 + $0x88] sm:$0xff]
    %v1273 = vld [vmem:[#allocation4 + $0x90] sm:$0xff]
    %v1274 = vld [vmem:[#allocation4 + $0x98] sm:$0xff]
    %v1275 = vld [vmem:[#allocation4 + $0xa0] sm:$0xff]
    %v1276 = vld [vmem:[#allocation4 + $0xa8] sm:$0xff]
    %v1277 = vld [vmem:[#allocation4 + $0xb0] sm:$0xff]
    %v1278 = vld [vmem:[#allocation4 + $0xb8] sm:$0xff]
    %v1279 = vld [vmem:[#allocation4 + $0xc0] sm:$0xff]
    %v1280 = vld [vmem:[#allocation4 + $0xc8] sm:$0xff]
    %v1281 = vld [vmem:[#allocation4 + $0xd0] sm:$0xff]
    %v1282 = vld [vmem:[#allocation4 + $0xd8] sm:$0xff]
    %v1283 = vld [vmem:[#allocation4 + $0xe0] sm:$0xff]
    %v1284 = vld [vmem:[#allocation4 + $0xe8] sm:$0xff]
    %v1285 = vld [vmem:[#allocation4 + $0xf0] sm:$0xff]
    %v1286 = vld [vmem:[#allocation4 + $0xf8] sm:$0xff]
    %v1287 = vld [vmem:[%s11] sm:$0xf]
    %v1289 = vperm.slane %v1287, 0
    %v1290 = vperm.slane %v1287, 1
    %v1291 = vperm.slane %v1287, 2
    %v1292 = vperm.slane %v1287, 3
    %v1329 = vunpack.c.l.b16 %v1255
    %v1330 = vunpack.c.h.b16 %v1255
    %v1331 = vunpack.c.l.b16 %v1256
    %v1332 = vunpack.c.h.b16 %v1256
    %v1333 = vunpack.c.l.b16 %v1257
    %v1334 = vunpack.c.h.b16 %v1257
    %v1335 = vunpack.c.l.b16 %v1258
    %v1336 = vunpack.c.h.b16 %v1258
    %v1337 = vunpack.c.l.b16 %v1259
    %v1338 = vunpack.c.h.b16 %v1259
    %v1339 = vunpack.c.l.b16 %v1260
    %v1340 = vunpack.c.h.b16 %v1260
    %v1341 = vunpack.c.l.b16 %v1261
    %v1342 = vunpack.c.h.b16 %v1261
    %v1343 = vunpack.c.l.b16 %v1262
    %v1344 = vunpack.c.h.b16 %v1262
    %v1345 = vunpack.c.l.b16 %v1263
    %v1346 = vunpack.c.h.b16 %v1263
    %v1347 = vunpack.c.l.b16 %v1264
    %v1348 = vunpack.c.h.b16 %v1264
    %v1349 = vunpack.c.l.b16 %v1265
    %v1350 = vunpack.c.h.b16 %v1265
    %v1351 = vunpack.c.l.b16 %v1266
    %v1352 = vunpack.c.h.b16 %v1266
    %v1353 = vunpack.c.l.b16 %v1267
    %v1354 = vunpack.c.h.b16 %v1267
    %v1355 = vunpack.c.l.b16 %v1268
    %v1356 = vunpack.c.h.b16 %v1268
    %v1357 = vunpack.c.l.b16 %v1269
    %v1358 = vunpack.c.h.b16 %v1269
    %v1359 = vunpack.c.l.b16 %v1270
    %v1360 = vunpack.c.h.b16 %v1270
    %v1361 = vunpack.c.l.b16 %v1271
    %v1362 = vunpack.c.h.b16 %v1271
    %v1363 = vunpack.c.l.b16 %v1272
    %v1364 = vunpack.c.h.b16 %v1272
    %v1365 = vunpack.c.l.b16 %v1273
    %v1366 = vunpack.c.h.b16 %v1273
    %v1367 = vunpack.c.l.b16 %v1274
    %v1368 = vunpack.c.h.b16 %v1274
    %v1369 = vunpack.c.l.b16 %v1275
    %v1370 = vunpack.c.h.b16 %v1275
    %v1371 = vunpack.c.l.b16 %v1276
    %v1372 = vunpack.c.h.b16 %v1276
    %v1373 = vunpack.c.l.b16 %v1277
    %v1374 = vunpack.c.h.b16 %v1277
    %v1375 = vunpack.c.l.b16 %v1278
    %v1376 = vunpack.c.h.b16 %v1278
    %v1377 = vunpack.c.l.b16 %v1279
    %v1378 = vunpack.c.h.b16 %v1279
    %v1379 = vunpack.c.l.b16 %v1280
    %v1380 = vunpack.c.h.b16 %v1280
    %v1381 = vunpack.c.l.b16 %v1281
    %v1382 = vunpack.c.h.b16 %v1281
    %v1383 = vunpack.c.l.b16 %v1282
    %v1384 = vunpack.c.h.b16 %v1282
    %v1385 = vunpack.c.l.b16 %v1283
    %v1386 = vunpack.c.h.b16 %v1283
    %v1387 = vunpack.c.l.b16 %v1284
    %v1388 = vunpack.c.h.b16 %v1284
    %v1389 = vunpack.c.l.b16 %v1285
    %v1390 = vunpack.c.h.b16 %v1285
    %v1391 = vunpack.c.l.b16 %v1286
    %v1392 = vunpack.c.h.b16 %v1286
    %v1393 = vpack.c.b16 %v1333, %v1329
    %v1394 = vpack.c.b16 %v1334, %v1330
    %v1395 = vpack.c.b16 %v1335, %v1331
    %v1396 = vpack.c.b16 %v1336, %v1332
    %v1397 = vpack.c.b16 %v1341, %v1337
    %v1398 = vpack.c.b16 %v1342, %v1338
    %v1399 = vpack.c.b16 %v1343, %v1339
    %v1400 = vpack.c.b16 %v1344, %v1340
    %v1401 = vpack.c.b16 %v1349, %v1345
    %v1402 = vpack.c.b16 %v1350, %v1346
    %v1403 = vpack.c.b16 %v1351, %v1347
    %v1404 = vpack.c.b16 %v1352, %v1348
    %v1405 = vpack.c.b16 %v1357, %v1353
    %v1406 = vpack.c.b16 %v1358, %v1354
    %v1407 = vpack.c.b16 %v1359, %v1355
    %v1408 = vpack.c.b16 %v1360, %v1356
    %v1409 = vpack.c.b16 %v1365, %v1361
    %v1410 = vpack.c.b16 %v1366, %v1362
    %v1411 = vpack.c.b16 %v1367, %v1363
    %v1412 = vpack.c.b16 %v1368, %v1364
    %v1413 = vpack.c.b16 %v1373, %v1369
    %v1414 = vpack.c.b16 %v1374, %v1370
    %v1415 = vpack.c.b16 %v1375, %v1371
    %v1416 = vpack.c.b16 %v1376, %v1372
    %v1417 = vpack.c.b16 %v1381, %v1377
    %v1418 = vpack.c.b16 %v1382, %v1378
    %v1419 = vpack.c.b16 %v1383, %v1379
    %v1420 = vpack.c.b16 %v1384, %v1380
    %v1421 = vpack.c.b16 %v1389, %v1385
    %v1422 = vpack.c.b16 %v1390, %v1386
    %v1423 = vpack.c.b16 %v1391, %v1387
    %v1424 = vpack.c.b16 %v1392, %v1388
    %1457 = vmatpush.bf16.msra.mxu0 %v1421
    %1458 = vmatpush.bf16.msra.mxu0 %v1417
    %1459 = vmatpush.bf16.msra.mxu0 %v1413
    %1460 = vmatpush.bf16.msra.mxu0 %v1409
    %1461 = vmatpush.bf16.msra.mxu0 %v1405
    %1462 = vmatpush.bf16.msra.mxu0 %v1401
    %1463 = vmatpush.bf16.msra.mxu0 %v1397
    %1464 = vmatpush.bf16.msra.mxu0 %v1393
    %1465 = vmatmul.bf16.gmra.mxu0 %v1254
    %v1466 = vpop.f32.mrf.mxu0
    %v1467 = vadd.f32 %v1289, %v1466
    %v1468 = vpop.f32.mrf.mxu0
    %v1469 = vadd.f32 %v1289, %v1468
    %1470 = vdwg.mxu0
    %1471 = vmatpush.bf16.msra.mxu0 %v1422
    %1472 = vmatpush.bf16.msra.mxu0 %v1418
    %1473 = vmatpush.bf16.msra.mxu0 %v1414
    %1474 = vmatpush.bf16.msra.mxu0 %v1410
    %1475 = vmatpush.bf16.msra.mxu0 %v1406
    %1476 = vmatpush.bf16.msra.mxu0 %v1402
    %1477 = vmatpush.bf16.msra.mxu0 %v1398
    %1478 = vmatpush.bf16.msra.mxu0 %v1394
    %1479 = vmatmul.bf16.gmra.mxu0 %v1254
    %v1480 = vpop.f32.mrf.mxu0
    %v1481 = vadd.f32 %v1290, %v1480
    %v1482 = vpop.f32.mrf.mxu0
    %v1483 = vadd.f32 %v1290, %v1482
    %1484 = vdwg.mxu0
    %1485 = vmatpush.bf16.msra.mxu0 %v1423
    %1486 = vmatpush.bf16.msra.mxu0 %v1419
    %1487 = vmatpush.bf16.msra.mxu0 %v1415
    %1488 = vmatpush.bf16.msra.mxu0 %v1411
    %1489 = vmatpush.bf16.msra.mxu0 %v1407
    %1490 = vmatpush.bf16.msra.mxu0 %v1403
    %1491 = vmatpush.bf16.msra.mxu0 %v1399
    %1492 = vmatpush.bf16.msra.mxu0 %v1395
    %1493 = vmatmul.bf16.gmra.mxu0 %v1254
    %v1494 = vpop.f32.mrf.mxu0
    %v1495 = vadd.f32 %v1291, %v1494
    %v1496 = vpop.f32.mrf.mxu0
    %v1497 = vadd.f32 %v1291, %v1496
    %1498 = vdwg.mxu0
    %1499 = vmatpush.bf16.msra.mxu0 %v1424
    %1500 = vmatpush.bf16.msra.mxu0 %v1420
    %1501 = vmatpush.bf16.msra.mxu0 %v1416
    %1502 = vmatpush.bf16.msra.mxu0 %v1412
    %1503 = vmatpush.bf16.msra.mxu0 %v1408
    %1504 = vmatpush.bf16.msra.mxu0 %v1404
    %1505 = vmatpush.bf16.msra.mxu0 %v1400
    %1506 = vmatpush.bf16.msra.mxu0 %v1396
    %1507 = vmatmul.bf16.gmra.mxu0 %v1254
    %v1508 = vpop.f32.mrf.mxu0
    %v1509 = vadd.f32 %v1292, %v1508
    %v1510 = vpop.f32.mrf.mxu0
    %v1511 = vadd.f32 %v1292, %v1510
    %1512 = vdwg.mxu0
    %v1513 = vmul.f32 %v1467, 0.5
    %v1514 = vmul.f32 %v1481, 0.5
    %v1515 = vmul.f32 %v1495, 0.5
    %v1516 = vmul.f32 %v1509, 0.5
    %v1517 = vmul.f32 %v1469, 0.5
    %v1518 = vmul.f32 %v1483, 0.5
    %v1519 = vmul.f32 %v1497, 0.5
    %v1520 = vmul.f32 %v1511, 0.5
    %v1521 = vmul.f32 %v1467, 0.044715
    %v1522 = vmul.f32 %v1481, 0.044715
    %v1523 = vmul.f32 %v1495, 0.044715
    %v1524 = vmul.f32 %v1509, 0.044715
    %v1525 = vmul.f32 %v1469, 0.044715
    %v1526 = vmul.f32 %v1483, 0.044715
    %v1527 = vmul.f32 %v1497, 0.044715
    %v1528 = vmul.f32 %v1511, 0.044715
    %v1529 = vmul.f32 %v1521, %v1467
    %v1530 = vmul.f32 %v1522, %v1481
    %v1531 = vmul.f32 %v1523, %v1495
    %v1532 = vmul.f32 %v1524, %v1509
    %v1533 = vmul.f32 %v1525, %v1469
    %v1534 = vmul.f32 %v1526, %v1483
    %v1535 = vmul.f32 %v1527, %v1497
    %v1536 = vmul.f32 %v1528, %v1511
    %v1537 = vmul.f32 %v1529, %v1467
    %v1538 = vmul.f32 %v1530, %v1481
    %v1539 = vmul.f32 %v1531, %v1495
    %v1540 = vmul.f32 %v1532, %v1509
    %v1541 = vmul.f32 %v1533, %v1469
    %v1542 = vmul.f32 %v1534, %v1483
    %v1543 = vmul.f32 %v1535, %v1497
    %v1544 = vmul.f32 %v1536, %v1511
    %v1545 = vadd.f32 %v1467, %v1537
    %v1546 = vadd.f32 %v1481, %v1538
    %v1547 = vadd.f32 %v1495, %v1539
    %v1548 = vadd.f32 %v1509, %v1540
    %v1549 = vadd.f32 %v1469, %v1541
    %v1550 = vadd.f32 %v1483, %v1542
    %v1551 = vadd.f32 %v1497, %v1543
    %v1552 = vadd.f32 %v1511, %v1544
    %v1553 = vmul.f32 %v1545, 0.7978846
    %v1554 = vmul.f32 %v1546, 0.7978846
    %v1555 = vmul.f32 %v1547, 0.7978846
    %v1556 = vmul.f32 %v1548, 0.7978846
    %v1557 = vmul.f32 %v1549, 0.7978846
    %v1558 = vmul.f32 %v1550, 0.7978846
    %v1559 = vmul.f32 %v1551, 0.7978846
    %v1560 = vmul.f32 %v1552, 0.7978846
    %v1561 = vtanh.pop %v1553
    %v1562 = vtanh.pop %v1554
    %v1563 = vtanh.pop %v1555
    %v1564 = vtanh.pop %v1556
    %v1565 = vtanh.pop %v1557
    %v1566 = vtanh.pop %v1558
    %v1567 = vtanh.pop %v1559
    %v1568 = vtanh.pop %v1560
    %v1569 = vadd.f32 %v1561, 1.0
    %v1570 = vadd.f32 %v1562, 1.0
    %v1571 = vadd.f32 %v1563, 1.0
    %v1572 = vadd.f32 %v1564, 1.0
    %v1573 = vadd.f32 %v1565, 1.0
    %v1574 = vadd.f32 %v1566, 1.0
    %v1575 = vadd.f32 %v1567, 1.0
    %v1576 = vadd.f32 %v1568, 1.0
    %v1577 = vmul.f32 %v1513, %v1569
    %v1578 = vmul.f32 %v1514, %v1570
    %v1579 = vmul.f32 %v1515, %v1571
    %v1580 = vmul.f32 %v1516, %v1572
    %v1581 = vmul.f32 %v1517, %v1573
    %v1582 = vmul.f32 %v1518, %v1574
    %v1583 = vmul.f32 %v1519, %v1575
    %v1584 = vmul.f32 %v1520, %v1576
    %v1585 = vpack.c.bf16 %v1581, %v1577
    %v1586 = vpack.c.bf16 %v1582, %v1578
    %v1587 = vpack.c.bf16 %v1583, %v1579
    %v1588 = vpack.c.bf16 %v1584, %v1580
    %v1589 = vld [vmem:[#allocation7] sm:$0xf]
    %v1590 = vld [vmem:[#allocation7 + $0x4] sm:$0xf]
    %v1591 = vld [vmem:[#allocation7 + $0x8] sm:$0xf]
    %v1592 = vld [vmem:[#allocation7 + $0xc] sm:$0xf]
    %v1593 = vld [vmem:[#allocation7 + $0x10] sm:$0xf]
    %v1594 = vld [vmem:[#allocation7 + $0x14] sm:$0xf]
    %v1595 = vld [vmem:[#allocation7 + $0x18] sm:$0xf]
    %v1596 = vld [vmem:[#allocation7 + $0x1c] sm:$0xf]
    %v1597 = vld [vmem:[#allocation7 + $0x20] sm:$0xf]
    %v1598 = vld [vmem:[#allocation7 + $0x24] sm:$0xf]
    %v1599 = vld [vmem:[#allocation7 + $0x28] sm:$0xf]
    %v1600 = vld [vmem:[#allocation7 + $0x2c] sm:$0xf]
    %v1601 = vld [vmem:[#allocation7 + $0x30] sm:$0xf]
    %v1602 = vld [vmem:[#allocation7 + $0x34] sm:$0xf]
    %v1603 = vld [vmem:[#allocation7 + $0x38] sm:$0xf]
    %v1604 = vld [vmem:[#allocation7 + $0x3c] sm:$0xf]
    %v1605 = vld [vmem:[#allocation7 + $0x40] sm:$0xf]
    %v1606 = vld [vmem:[#allocation7 + $0x44] sm:$0xf]
    %v1607 = vld [vmem:[#allocation7 + $0x48] sm:$0xf]
    %v1608 = vld [vmem:[#allocation7 + $0x4c] sm:$0xf]
    %v1609 = vld [vmem:[#allocation7 + $0x50] sm:$0xf]
    %v1610 = vld [vmem:[#allocation7 + $0x54] sm:$0xf]
    %v1611 = vld [vmem:[#allocation7 + $0x58] sm:$0xf]
    %v1612 = vld [vmem:[#allocation7 + $0x5c] sm:$0xf]
    %v1613 = vld [vmem:[#allocation7 + $0x60] sm:$0xf]
    %v1614 = vld [vmem:[#allocation7 + $0x64] sm:$0xf]
    %v1615 = vld [vmem:[#allocation7 + $0x68] sm:$0xf]
    %v1616 = vld [vmem:[#allocation7 + $0x6c] sm:$0xf]
    %v1617 = vld [vmem:[#allocation7 + $0x70] sm:$0xf]
    %v1618 = vld [vmem:[#allocation7 + $0x74] sm:$0xf]
    %v1619 = vld [vmem:[#allocation7 + $0x78] sm:$0xf]
    %v1620 = vld [vmem:[#allocation7 + $0x7c] sm:$0xf]
    %v1621 = vld [vmem:[#allocation7 + $0x80] sm:$0xf]
    %v1622 = vld [vmem:[#allocation7 + $0x84] sm:$0xf]
    %v1623 = vld [vmem:[#allocation7 + $0x88] sm:$0xf]
    %v1624 = vld [vmem:[#allocation7 + $0x8c] sm:$0xf]
    %v1625 = vld [vmem:[#allocation7 + $0x90] sm:$0xf]
    %v1626 = vld [vmem:[#allocation7 + $0x94] sm:$0xf]
    %v1627 = vld [vmem:[#allocation7 + $0x98] sm:$0xf]
    %v1628 = vld [vmem:[#allocation7 + $0x9c] sm:$0xf]
    %v1629 = vld [vmem:[#allocation7 + $0xa0] sm:$0xf]
    %v1630 = vld [vmem:[#allocation7 + $0xa4] sm:$0xf]
    %v1631 = vld [vmem:[#allocation7 + $0xa8] sm:$0xf]
    %v1632 = vld [vmem:[#allocation7 + $0xac] sm:$0xf]
    %v1633 = vld [vmem:[#allocation7 + $0xb0] sm:$0xf]
    %v1634 = vld [vmem:[#allocation7 + $0xb4] sm:$0xf]
    %v1635 = vld [vmem:[#allocation7 + $0xb8] sm:$0xf]
    %v1636 = vld [vmem:[#allocation7 + $0xbc] sm:$0xf]
    %v1637 = vld [vmem:[#allocation7 + $0xc0] sm:$0xf]
    %v1638 = vld [vmem:[#allocation7 + $0xc4] sm:$0xf]
    %v1639 = vld [vmem:[#allocation7 + $0xc8] sm:$0xf]
    %v1640 = vld [vmem:[#allocation7 + $0xcc] sm:$0xf]
    %v1641 = vld [vmem:[#allocation7 + $0xd0] sm:$0xf]
    %v1642 = vld [vmem:[#allocation7 + $0xd4] sm:$0xf]
    %v1643 = vld [vmem:[#allocation7 + $0xd8] sm:$0xf]
    %v1644 = vld [vmem:[#allocation7 + $0xdc] sm:$0xf]
    %v1645 = vld [vmem:[#allocation7 + $0xe0] sm:$0xf]
    %v1646 = vld [vmem:[#allocation7 + $0xe4] sm:$0xf]
    %v1647 = vld [vmem:[#allocation7 + $0xe8] sm:$0xf]
    %v1648 = vld [vmem:[#allocation7 + $0xec] sm:$0xf]
    %v1649 = vld [vmem:[#allocation7 + $0xf0] sm:$0xf]
    %v1650 = vld [vmem:[#allocation7 + $0xf4] sm:$0xf]
    %v1651 = vld [vmem:[#allocation7 + $0xf8] sm:$0xf]
    %v1652 = vld [vmem:[#allocation7 + $0xfc] sm:$0xf]
    %v1653 = vld [vmem:[%s13] sm:$0x1]
    %v1655 = vperm.slane %v1653, 0
    %v1721 = vunpack.c.l.b16 %v1589
    %v1722 = vunpack.c.l.b16 %v1590
    %v1723 = vunpack.c.l.b16 %v1591
    %v1724 = vunpack.c.l.b16 %v1592
    %v1725 = vunpack.c.l.b16 %v1593
    %v1726 = vunpack.c.l.b16 %v1594
    %v1727 = vunpack.c.l.b16 %v1595
    %v1728 = vunpack.c.l.b16 %v1596
    %v1729 = vunpack.c.l.b16 %v1597
    %v1730 = vunpack.c.l.b16 %v1598
    %v1731 = vunpack.c.l.b16 %v1599
    %v1732 = vunpack.c.l.b16 %v1600
    %v1733 = vunpack.c.l.b16 %v1601
    %v1734 = vunpack.c.l.b16 %v1602
    %v1735 = vunpack.c.l.b16 %v1603
    %v1736 = vunpack.c.l.b16 %v1604
    %v1737 = vunpack.c.l.b16 %v1605
    %v1738 = vunpack.c.l.b16 %v1606
    %v1739 = vunpack.c.l.b16 %v1607
    %v1740 = vunpack.c.l.b16 %v1608
    %v1741 = vunpack.c.l.b16 %v1609
    %v1742 = vunpack.c.l.b16 %v1610
    %v1743 = vunpack.c.l.b16 %v1611
    %v1744 = vunpack.c.l.b16 %v1612
    %v1745 = vunpack.c.l.b16 %v1613
    %v1746 = vunpack.c.l.b16 %v1614
    %v1747 = vunpack.c.l.b16 %v1615
    %v1748 = vunpack.c.l.b16 %v1616
    %v1749 = vunpack.c.l.b16 %v1617
    %v1750 = vunpack.c.l.b16 %v1618
    %v1751 = vunpack.c.l.b16 %v1619
    %v1752 = vunpack.c.l.b16 %v1620
    %v1753 = vunpack.c.l.b16 %v1621
    %v1754 = vunpack.c.l.b16 %v1622
    %v1755 = vunpack.c.l.b16 %v1623
    %v1756 = vunpack.c.l.b16 %v1624
    %v1757 = vunpack.c.l.b16 %v1625
    %v1758 = vunpack.c.l.b16 %v1626
    %v1759 = vunpack.c.l.b16 %v1627
    %v1760 = vunpack.c.l.b16 %v1628
    %v1761 = vunpack.c.l.b16 %v1629
    %v1762 = vunpack.c.l.b16 %v1630
    %v1763 = vunpack.c.l.b16 %v1631
    %v1764 = vunpack.c.l.b16 %v1632
    %v1765 = vunpack.c.l.b16 %v1633
    %v1766 = vunpack.c.l.b16 %v1634
    %v1767 = vunpack.c.l.b16 %v1635
    %v1768 = vunpack.c.l.b16 %v1636
    %v1769 = vunpack.c.l.b16 %v1637
    %v1770 = vunpack.c.l.b16 %v1638
    %v1771 = vunpack.c.l.b16 %v1639
    %v1772 = vunpack.c.l.b16 %v1640
    %v1773 = vunpack.c.l.b16 %v1641
    %v1774 = vunpack.c.l.b16 %v1642
    %v1775 = vunpack.c.l.b16 %v1643
    %v1776 = vunpack.c.l.b16 %v1644
    %v1777 = vunpack.c.l.b16 %v1645
    %v1778 = vunpack.c.l.b16 %v1646
    %v1779 = vunpack.c.l.b16 %v1647
    %v1780 = vunpack.c.l.b16 %v1648
    %v1781 = vunpack.c.l.b16 %v1649
    %v1782 = vunpack.c.l.b16 %v1650
    %v1783 = vunpack.c.l.b16 %v1651
    %v1784 = vunpack.c.l.b16 %v1652
    %v1785 = vpack.c.b16 %v1722, %v1721
    %v1786 = vpack.c.b16 %v1724, %v1723
    %v1787 = vpack.c.b16 %v1726, %v1725
    %v1788 = vpack.c.b16 %v1728, %v1727
    %v1789 = vpack.c.b16 %v1730, %v1729
    %v1790 = vpack.c.b16 %v1732, %v1731
    %v1791 = vpack.c.b16 %v1734, %v1733
    %v1792 = vpack.c.b16 %v1736, %v1735
    %v1793 = vpack.c.b16 %v1738, %v1737
    %v1794 = vpack.c.b16 %v1740, %v1739
    %v1795 = vpack.c.b16 %v1742, %v1741
    %v1796 = vpack.c.b16 %v1744, %v1743
    %v1797 = vpack.c.b16 %v1746, %v1745
    %v1798 = vpack.c.b16 %v1748, %v1747
    %v1799 = vpack.c.b16 %v1750, %v1749
    %v1800 = vpack.c.b16 %v1752, %v1751
    %v1801 = vpack.c.b16 %v1754, %v1753
    %v1802 = vpack.c.b16 %v1756, %v1755
    %v1803 = vpack.c.b16 %v1758, %v1757
    %v1804 = vpack.c.b16 %v1760, %v1759
    %v1805 = vpack.c.b16 %v1762, %v1761
    %v1806 = vpack.c.b16 %v1764, %v1763
    %v1807 = vpack.c.b16 %v1766, %v1765
    %v1808 = vpack.c.b16 %v1768, %v1767
    %v1809 = vpack.c.b16 %v1770, %v1769
    %v1810 = vpack.c.b16 %v1772, %v1771
    %v1811 = vpack.c.b16 %v1774, %v1773
    %v1812 = vpack.c.b16 %v1776, %v1775
    %v1813 = vpack.c.b16 %v1778, %v1777
    %v1814 = vpack.c.b16 %v1780, %v1779
    %v1815 = vpack.c.b16 %v1782, %v1781
    %v1816 = vpack.c.b16 %v1784, %v1783
    %1849 = vmatpush.bf16.msra.mxu0 %v1792
    %1850 = vmatpush.bf16.msra.mxu0 %v1791
    %1851 = vmatpush.bf16.msra.mxu0 %v1790
    %1852 = vmatpush.bf16.msra.mxu0 %v1789
    %1853 = vmatpush.bf16.msra.mxu0 %v1788
    %1854 = vmatpush.bf16.msra.mxu0 %v1787
    %1855 = vmatpush.bf16.msra.mxu0 %v1786
    %1856 = vmatpush.bf16.msra.mxu0 %v1785
    %1857 = vmatmul.bf16.gmra.mxu0 %v1585
    %v1858 = vpop.f32.mrf.mxu0
    %v1859 = vadd.f32 %v1655, %v1858
    %v1860 = vpop.f32.mrf.mxu0
    %v1861 = vadd.f32 %v1655, %v1860
    %1862 = vdwg.mxu0
    %1863 = vmatpush.bf16.msra.mxu0 %v1800
    %1864 = vmatpush.bf16.msra.mxu0 %v1799
    %1865 = vmatpush.bf16.msra.mxu0 %v1798
    %1866 = vmatpush.bf16.msra.mxu0 %v1797
    %1867 = vmatpush.bf16.msra.mxu0 %v1796
    %1868 = vmatpush.bf16.msra.mxu0 %v1795
    %1869 = vmatpush.bf16.msra.mxu0 %v1794
    %1870 = vmatpush.bf16.msra.mxu0 %v1793
    %1871 = vmatmul.bf16.gmra.mxu0 %v1586
    %v1872 = vpop.f32.mrf.mxu0
    %v1873 = vadd.f32 %v1859, %v1872
    %v1874 = vpop.f32.mrf.mxu0
    %v1875 = vadd.f32 %v1861, %v1874
    %1876 = vdwg.mxu0
    %1877 = vmatpush.bf16.msra.mxu0 %v1808
    %1878 = vmatpush.bf16.msra.mxu0 %v1807
    %1879 = vmatpush.bf16.msra.mxu0 %v1806
    %1880 = vmatpush.bf16.msra.mxu0 %v1805
    %1881 = vmatpush.bf16.msra.mxu0 %v1804
    %1882 = vmatpush.bf16.msra.mxu0 %v1803
    %1883 = vmatpush.bf16.msra.mxu0 %v1802
    %1884 = vmatpush.bf16.msra.mxu0 %v1801
    %1885 = vmatmul.bf16.gmra.mxu0 %v1587
    %v1886 = vpop.f32.mrf.mxu0
    %v1887 = vadd.f32 %v1873, %v1886
    %v1888 = vpop.f32.mrf.mxu0
    %v1889 = vadd.f32 %v1875, %v1888
    %1890 = vdwg.mxu0
    %1891 = vmatpush.bf16.msra.mxu0 %v1816
    %1892 = vmatpush.bf16.msra.mxu0 %v1815
    %1893 = vmatpush.bf16.msra.mxu0 %v1814
    %1894 = vmatpush.bf16.msra.mxu0 %v1813
    %1895 = vmatpush.bf16.msra.mxu0 %v1812
    %1896 = vmatpush.bf16.msra.mxu0 %v1811
    %1897 = vmatpush.bf16.msra.mxu0 %v1810
    %1898 = vmatpush.bf16.msra.mxu0 %v1809
    %1899 = vmatmul.bf16.gmra.mxu0 %v1588
    %v1900 = vpop.f32.mrf.mxu0
    %v1901 = vadd.f32 %v1887, %v1900
    %v1902 = vpop.f32.mrf.mxu0
    %v1903 = vadd.f32 %v1889, %v1902
    %1904 = vdwg.mxu0
    %1905 = vst [vmem:[#allocation9] sm:$0xff] %v1901
    %1906 = vst [vmem:[#allocation9 + $0x8] sm:$0xff] %v1903
    // Predicated region
    $region66: #{tpu_custom_call.1} parent=1 // pred_check
      _
    $region67: #{tpu_custom_call.1} parent=1 // pred_check_branch
      %1908 = sbr.rel (0) target = $region69
    $region68: #{tpu_custom_call.1} parent=1 // pred_region
      %1910 = vsyncadd [#allocation6], 0
      %s1911 = sshll.u32 [#allocation9], 4
      %s1912 = int_to_ptr.vmem [resolvable:$true] %s1911
      %s1913 = sshll.u32 %s14, 4
      %s1914 = int_to_ptr.hbm [resolvable:$true] %s1913
      %1919 = dma.vmem_to_hbm [thread:$0]  %s1912, 256, %s1914, [#allocation6], 128, 128, 8
    $region69: #{tpu_custom_call.1} parent=1 // pred_fallthru
      _
    // Predicated region
    $region70: #{tpu_custom_call.1} parent=1 // pred_check
      _
    $region71: #{tpu_custom_call.1} parent=1 // pred_check_branch
      %1921 = sbr.rel (0) target = $region73
    $region72: #{tpu_custom_call.1} parent=1 // pred_region
      %1923 = vsyncadd [#allocation11], 0
      %s1924 = sshll.u32 [#allocation10], 4
      %s1925 = int_to_ptr.vmem [resolvable:$true] %s1924
      %s1926 = sshll.u32 %s15, 4
      %s1927 = int_to_ptr.hbm [resolvable:$true] %s1926
      %1932 = dma.vmem_to_hbm [thread:$0]  %s1925, 256, %s1927, [#allocation11], 128, 128, 8
    $region73: #{tpu_custom_call.1} parent=1 // pred_fallthru
      _
    // Predicated region
    $region74: #{tpu_custom_call.1} parent=1 // pred_check
      _
    $region75: #{tpu_custom_call.1} parent=1 // pred_check_branch
      %1934 = sbr.rel (0) target = $region77
    $region76: #{tpu_custom_call.1} parent=1 // pred_region
      %1936 = dma.done [#allocation6], 256
    $region77: #{tpu_custom_call.1} parent=1 // pred_fallthru
      _
    // Predicated region
    $region78: #{tpu_custom_call.1} parent=1 // pred_check
      _
    $region79: #{tpu_custom_call.1} parent=1 // pred_check_branch
      %1938 = sbr.rel (0) target = $region81
    $region80: #{tpu_custom_call.1} parent=1 // pred_region
      %1940 = dma.done [#allocation11], 256
    $region81: #{tpu_custom_call.1} parent=1 // pred_fallthru
      _
    %1941 = vsyncpa [#allocation5], 1
    %1942 = vsyncpa [#allocation8], 1
    %1943 = vsyncpa [#allocation6], 1
    %1944 = vsyncpa [#allocation11], 1

</llo_original>
